<compile_context>
chip_gen: v7x
topology: tpu7x:2x2x1
jax: 0.10.0
libtpu: 0.0.40
codegen_flags: <defaults>
</compile_context>

<pallas_src>
import functools

import jax
import jax.numpy as jnp
import numpy as np
from jax.experimental import pallas as pl
from jax.experimental.pallas import tpu as pltpu


def _unet_up_kernel(xp_ref, w_ref, out_ref, sum_ref, sq_ref, *,
                    R, W, Ci, Co, eps, inv_count):
    """One grid step of the fused ConvTranspose2d(4,2,1) + InstanceNorm + ReLU.

    grid = (N, 2, H // R): axis 1 is the pass (0 = stats accumulation, 1 = normalize
    + store), axis 2 is the row tile.  The padded input block is VMEM-resident across
    both passes of a sample, so the pass-1 recompute adds no HBM traffic.
    """
    p_pass = pl.program_id(1)
    r = pl.program_id(2)
    row0 = r * R

    @pl.when(jnp.logical_and(p_pass == 0, r == 0))
    def _reset():
        sum_ref[...] = jnp.zeros_like(sum_ref)
        sq_ref[...] = jnp.zeros_like(sq_ref)

    # Sub-pixel decomposition: output pixel (2i+a, 2j+b) only needs the 4 shifted input
    # views (s, t) = (a+dh, b+dw), dh,dw in {0,1}.  Only the 16 valid (view, sub-pixel)
    # taps exist in w_ref -> no zero-block MXU work, no wide lane-concatenate.
    views = {}
    ys = []                                           # index p = 2a + b -> (R*W, Co) f32
    for a in range(2):
        for b in range(2):
            acc = None
            for dh in range(2):
                for dw in range(2):
                    s, t = a + dh, b + dw
                    if (s, t) not in views:
                        v = xp_ref[0, pl.ds(row0 + s, R), pl.ds(t, W), :]  # (R, W, Ci) bf16
                        views[(s, t)] = v.reshape(R * W, Ci)
                    d = jnp.dot(views[(s, t)], w_ref[a, b, dh, dw],
                                preferred_element_type=jnp.float32)
                    acc = d if acc is None else acc + d
            ys.append(acc)

    @pl.when(p_pass == 0)
    def _stats():
        s_part = jnp.zeros((1, Co), jnp.float32)
        q_part = jnp.zeros((1, Co), jnp.float32)
        for y in ys:
            s_part = s_part + jnp.sum(y, axis=0, keepdims=True)
            q_part = q_part + jnp.sum(y * y, axis=0, keepdims=True)
        sum_ref[...] += s_part
        sq_ref[...] += q_part

    @pl.when(p_pass == 1)
    def _normalize_store():
        mean = sum_ref[...] * inv_count                       # (1, Co) f32
        var = jnp.maximum(sq_ref[...] * inv_count - mean * mean, 0.0)
        inv = jax.lax.rsqrt(var + eps)
        for p, y in enumerate(ys):
            yn = jnp.maximum((y - mean) * inv, 0.0)           # InstanceNorm + ReLU, f32
            out_ref[0, p, :, :, :] = yn.reshape(R, W, Co).astype(out_ref.dtype)


def _pick_row_tile(H, W, Ci, Co, out_bytes, budget_bytes=24 << 20):
    """Largest divisor of H whose per-step working set fits a conservative budget."""
    best = 1
    for R in range(1, H + 1):
        if H % R:
            continue
        step = (8 * R * W * Co * 4            # 4 f32 sub-pixel accumulators + norm temps
                + 9 * R * W * Ci * 2          # shifted-view copies (bf16, worst case)
                + 2 * 4 * R * W * Co * out_bytes)   # double-buffered output block
        if step <= budget_bytes:
            best = R
    return best


def _weight_block_spec(Ci, Co):
    idx = lambda n, p, r: (0, 0, 0, 0, 0, 0)
    # Grid-invariant weight: single-buffer it to halve its VMEM residency (matters on
    # v7x at production widths).  Guarded so older APIs fall back to the default spec.
    if hasattr(pl, "Buffered"):
        try:
            return pl.BlockSpec((2, 2, 2, 2, Ci, Co), idx, pipeline_mode=pl.Buffered(1))
        except TypeError:
            pass
    return pl.BlockSpec((2, 2, 2, 2, Ci, Co), idx)


def unet_up_forward(x_nchw, skip_nchw, weight, *, eps=1e-5, row_tile=None,
                    conv_out_dtype=jnp.bfloat16):
    """UNetUp forward.  weight: PyTorch ConvTranspose2d layout (Ci, Co, 4, 4)."""
    N, Ci, H, W = x_nchw.shape
    Ns, Cs, H2, W2 = skip_nchw.shape
    Co = weight.shape[1]
    # ConvTranspose2d(4,2,1) output is exactly (2H, 2W); in this UNet the skip matches.
    # TODO(synk): F.interpolate fallback for mismatched skip spatial sizes not implemented.
    assert Ns == N and (H2, W2) == (2 * H, 2 * W), "skip must be (N, Cs, 2H, 2W)"

    out_bytes = np.dtype(conv_out_dtype).itemsize
    if row_tile is None:
        row_tile = _pick_row_tile(H, W, Ci, Co, out_bytes)
    R = int(row_tile)
    assert H % R == 0, "row_tile must divide H"
    T = H // R

    # Single padded channels-last copy of the input, bf16 (kernel slices the 9 views).
    # NOTE: keep W a multiple of 8 where possible so in-kernel (R,W,Ci)->(R*W,Ci)
    # reshapes stay layout-preserving (true at this module's power-of-two sizes).
    xp = jnp.pad(jnp.transpose(x_nchw, (0, 2, 3, 1)),
                 ((0, 0), (1, 1), (1, 1), (0, 0))).astype(jnp.bfloat16)

    # Pack ONLY the 16 valid taps: w_packed[a, b, dh, dw] = weight[:, :, 3-a-2dh, 3-b-2dw].
    taps = []
    for a in range(2):
        for b in range(2):
            for dh in range(2):
                for dw in range(2):
                    taps.append(weight[:, :, 3 - a - 2 * dh, 3 - b - 2 * dw])
    w_packed = jnp.stack(taps, axis=0).reshape(2, 2, 2, 2, Ci, Co).astype(jnp.bfloat16)

    kernel = functools.partial(_unet_up_kernel, R=R, W=W, Ci=Ci, Co=Co, eps=eps,
                               inv_count=1.0 / float(4 * H * W))

    # VMEM budget: resident blocks + per-step intermediates (v2 under-counted these),
    # capped per generation with headroom below physical VMEM for compiler scratch.
    resident = (2 * (H + 2) * (W + 2) * Ci * 2       # padded input, double-buffered
                + 16 * Ci * Co * 2)                  # packed weight, single-buffered
    step = (8 * R * W * Co * 4                       # f32 accumulators + norm temps
            + 9 * R * W * Ci * 2                     # shifted-view copies
            + 2 * 4 * R * W * Co * out_bytes)        # double-buffered output block
    needed = resident + step + (8 << 20)
    try:
        phys = int(pltpu.get_tpu_info().vmem_capacity_bytes)
    except Exception:
        phys = 64 << 20                              # conservative (v7x per-core VMEM)
    cap = phys - (12 << 20) if phys <= (64 << 20) else phys - (28 << 20)
    vmem_limit = int(min(max(needed, 32 << 20), cap))

    out_sub = pl.pallas_call(
        kernel,
        out_shape=jax.ShapeDtypeStruct((N, 4, H, W, Co), conv_out_dtype),
        grid_spec=pltpu.PrefetchScalarGridSpec(
            num_scalar_prefetch=0,
            # (sample, pass, row-tile); pass 0 = stats, pass 1 = normalize + store.
            grid=(N, 2, T),
            in_specs=[
                # Padded input: resident across both passes / all row tiles of a sample.
                pl.BlockSpec((1, H + 2, W + 2, Ci), lambda n, p, r: (n, 0, 0, 0)),
                _weight_block_spec(Ci, Co),
            ],
            # During pass 0 every step maps to row-tile 0 (r*p == 0), so nothing is
            # written back until pass 1 fully overwrites each tile -> each output block
            # is written to HBM exactly once, with final data.
            out_specs=pl.BlockSpec((1, 4, R, W, Co),
                                   lambda n, p, r: (n, 0, r * p, 0, 0)),
            scratch_shapes=[pltpu.VMEM((1, Co), jnp.float32),    # per-channel sum
                            pltpu.VMEM((1, Co), jnp.float32)],   # per-channel sum of sq.
        ),
        compiler_params=pltpu.CompilerParams(
            dimension_semantics=("parallel", "arbitrary", "arbitrary"),
            vmem_limit_bytes=vmem_limit,
        ),
    )(xp, w_packed)

    # Sub-pixel re-interleave back to NCHW (on bf16 -> half the transpose traffic), then
    # torch.cat((x, skip), 1) as a plain concat; skip passes through untouched (f32).
    conv = (out_sub.reshape(N, 2, 2, H, W, Co)
            .transpose(0, 5, 3, 1, 4, 2)
            .reshape(N, Co, 2 * H, 2 * W))
    return jnp.concatenate([conv.astype(skip_nchw.dtype), skip_nchw], axis=1)


def _reference(x, skip, weight, eps=1e-5):
    """Pure-JAX f32 reference for ConvTranspose2d + InstanceNorm2d + ReLU + cat."""
    w_flip = jnp.transpose(weight[:, :, ::-1, ::-1], (1, 0, 2, 3))   # (Co, Ci, 4, 4)
    y = jax.lax.conv_general_dilated(
        x, w_flip, window_strides=(1, 1), padding=((2, 2), (2, 2)),
        lhs_dilation=(2, 2), dimension_numbers=("NCHW", "OIHW", "NCHW"))
    mean = jnp.mean(y, axis=(2, 3), keepdims=True)
    var = jnp.mean(jnp.square(y - mean), axis=(2, 3), keepdims=True)
    y = jnp.maximum((y - mean) * jax.lax.rsqrt(var + eps), 0.0)
    return jnp.concatenate([y, skip], axis=1)


def _make_case(key, N, Ci, Co, Cs, H, W):
    k1, k2, k3 = jax.random.split(key, 3)
    x = jax.random.normal(k1, (N, Ci, H, W), jnp.float32)                # NCHW
    skip = jax.random.normal(k2, (N, Cs, 2 * H, 2 * W), jnp.float32)     # NCHW, 2x spatial
    bound = 1.0 / np.sqrt(Ci * 4 * 4)
    w = jax.random.uniform(k3, (Ci, Co, 4, 4), jnp.float32, -bound, bound)
    return x, skip, w


if __name__ == "__main__":
    key = jax.random.PRNGKey(0)
    k1, k2 = jax.random.split(key)

    # Case 1: shaped like the module's up4 stage at size_factor=1; row_tile=4 gives two
    # row tiles per sample, exercising the cross-tile two-pass InstanceNorm accumulation.
    x, skip, w = _make_case(k1, N=2, Ci=32, Co=16, Cs=16, H=8, W=8)
    run = jax.jit(functools.partial(unet_up_forward, row_tile=4))
    out = jax.block_until_ready(run(x, skip, w))
    assert out.shape == (2, 32, 16, 16)
    ref = _reference(x, skip, w)
    # bf16 matmul inputs / bf16 conv output vs. an f32 reference -> loose tolerance.
    np.testing.assert_allclose(np.asarray(out), np.asarray(ref), rtol=5e-2, atol=5e-2)

    # Case 2: different channel widths, four row tiles per sample.
    x2, skip2, w2 = _make_case(k2, N=1, Ci=16, Co=8, Cs=24, H=8, W=16)
    run2 = jax.jit(functools.partial(unet_up_forward, row_tile=2))
    out2 = jax.block_until_ready(run2(x2, skip2, w2))
    assert out2.shape == (1, 32, 16, 32)
    ref2 = _reference(x2, skip2, w2)
    np.testing.assert_allclose(np.asarray(out2), np.asarray(ref2), rtol=5e-2, atol=5e-2)

    print("KERNEL_OK")
</pallas_src>

<mosaic_0001>
module attributes {stable_mosaic.version = 11 : i64} {
  func.func @_unet_up_kernel(%arg0: i32, %arg1: i32, %arg2: i32, %arg3: memref<1x10x10x32xbf16, #tpu.memory_space<vmem>>, %arg4: memref<2x2x2x2x32x16xbf16, #tpu.memory_space<vmem>>, %arg5: memref<1x4x4x8x16xbf16, #tpu.memory_space<vmem>>, %arg6: memref<1x16xf32, #tpu.memory_space<vmem>>, %arg7: memref<1x16xf32, #tpu.memory_space<vmem>>) attributes {dimension_semantics = [#tpu.dimension_semantics<parallel>, #tpu.dimension_semantics<arbitrary>, #tpu.dimension_semantics<arbitrary>], iteration_bounds = array<i64: 2, 2, 2>, scalar_prefetch = 0 : i64, scratch_operands = 2 : i64, tpu.core_type = #tpu.core_type<tc>, window_params = [{transform_indices = @transform_0, window_bounds = array<i64: 1, 10, 10, 32>}, {pipeline_mode = #tpu.pipeline_mode<synchronous>, transform_indices = @transform_1, window_bounds = array<i64: 2, 2, 2, 2, 32, 16>}, {transform_indices = @transform_2, window_bounds = array<i64: 1, 4, 4, 8, 16>}]} {
    %c4_i32 = arith.constant 4 : i32
    %0 = arith.muli %arg2, %c4_i32 : i32
    %c0_i32 = arith.constant 0 : i32
    %1 = arith.cmpi eq, %arg1, %c0_i32 : i32
    %c0_i32_0 = arith.constant 0 : i32
    %2 = arith.cmpi eq, %arg2, %c0_i32_0 : i32
    %3 = arith.andi %1, %2 : i1
    %4 = arith.extui %3 : i1 to i32
    %c0_i32_1 = arith.constant 0 : i32
    %5 = arith.cmpi ne, %4, %c0_i32_1 : i32
    scf.if %5 {
      %cst_148 = arith.constant 0.000000e+00 : f32
      %117 = vector.broadcast %cst_148 : f32 to vector<1x16xf32>
      %c0_149 = arith.constant 0 : index
      %c0_150 = arith.constant 0 : index
      %118 = vector.load %arg6[%c0_149, %c0_150] : memref<1x16xf32, #tpu.memory_space<vmem>>, vector<1x16xf32>
      tpu.vector_store %arg6[%c0_149, %c0_150], %117 {strides = array<i32>} : memref<1x16xf32, #tpu.memory_space<vmem>>, vector<1x16xf32>,
      %cst_151 = arith.constant 0.000000e+00 : f32
      %119 = vector.broadcast %cst_151 : f32 to vector<1x16xf32>
      %c0_152 = arith.constant 0 : index
      %c0_153 = arith.constant 0 : index
      %120 = vector.load %arg7[%c0_152, %c0_153] : memref<1x16xf32, #tpu.memory_space<vmem>>, vector<1x16xf32>
      tpu.vector_store %arg7[%c0_152, %c0_153], %119 {strides = array<i32>} : memref<1x16xf32, #tpu.memory_space<vmem>>, vector<1x16xf32>,
    } else {
    }
    %c0_i32_2 = arith.constant 0 : i32
    %6 = arith.addi %0, %c0_i32_2 : i32
    %c0 = arith.constant 0 : index
    %7 = arith.index_cast %6 : i32 to index
    %c0_3 = arith.constant 0 : index
    %c0_4 = arith.constant 0 : index
    %8 = vector.load %arg3[%c0, %7, %c0_3, %c0_4] : memref<1x10x10x32xbf16, #tpu.memory_space<vmem>>, vector<1x4x8x32xbf16>
    %9 = vector.shape_cast %8 : vector<1x4x8x32xbf16> to vector<4x8x32xbf16>
    %10 = vector.shape_cast %9 : vector<4x8x32xbf16> to vector<32x32xbf16>
    %c0_5 = arith.constant 0 : index
    %c0_6 = arith.constant 0 : index
    %c0_7 = arith.constant 0 : index
    %c0_8 = arith.constant 0 : index
    %c0_9 = arith.constant 0 : index
    %c0_10 = arith.constant 0 : index
    %11 = vector.load %arg4[%c0_5, %c0_6, %c0_7, %c0_8, %c0_9, %c0_10] : memref<2x2x2x2x32x16xbf16, #tpu.memory_space<vmem>>, vector<1x1x1x1x32x16xbf16>
    %12 = vector.shape_cast %11 : vector<1x1x1x1x32x16xbf16> to vector<32x16xbf16>
    %cst = arith.constant dense<0.000000e+00> : vector<32x16xf32>
    %13 = tpu.matmul %10, %12, %cst {dimension_numbers = #tpu.dot_dimension_numbers<[1], [0], [0], [1], [0, 0, 1, 1], [], []>} : vector<32x32xbf16>, vector<32x16xbf16>, vector<32x16xf32> -> vector<32x16xf32>
    %c0_i32_11 = arith.constant 0 : i32
    %14 = arith.addi %0, %c0_i32_11 : i32
    %c0_12 = arith.constant 0 : index
    %15 = arith.index_cast %14 : i32 to index
    %c1 = arith.constant 1 : index
    %c0_13 = arith.constant 0 : index
    %16 = vector.load %arg3[%c0_12, %15, %c1, %c0_13] : memref<1x10x10x32xbf16, #tpu.memory_space<vmem>>, vector<1x4x8x32xbf16>
    %17 = vector.shape_cast %16 : vector<1x4x8x32xbf16> to vector<4x8x32xbf16>
    %18 = vector.shape_cast %17 : vector<4x8x32xbf16> to vector<32x32xbf16>
    %c0_14 = arith.constant 0 : index
    %c0_15 = arith.constant 0 : index
    %c0_16 = arith.constant 0 : index
    %c1_17 = arith.constant 1 : index
    %c0_18 = arith.constant 0 : index
    %c0_19 = arith.constant 0 : index
    %19 = vector.load %arg4[%c0_14, %c0_15, %c0_16, %c1_17, %c0_18, %c0_19] : memref<2x2x2x2x32x16xbf16, #tpu.memory_space<vmem>>, vector<1x1x1x1x32x16xbf16>
    %20 = vector.shape_cast %19 : vector<1x1x1x1x32x16xbf16> to vector<32x16xbf16>
    %cst_20 = arith.constant dense<0.000000e+00> : vector<32x16xf32>
    %21 = tpu.matmul %18, %20, %cst_20 {dimension_numbers = #tpu.dot_dimension_numbers<[1], [0], [0], [1], [0, 0, 1, 1], [], []>} : vector<32x32xbf16>, vector<32x16xbf16>, vector<32x16xf32> -> vector<32x16xf32>
    %22 = arith.addf %13, %21 : vector<32x16xf32>
    %c1_i32 = arith.constant 1 : i32
    %23 = arith.addi %0, %c1_i32 : i32
    %c0_21 = arith.constant 0 : index
    %24 = arith.index_cast %23 : i32 to index
    %c0_22 = arith.constant 0 : index
    %c0_23 = arith.constant 0 : index
    %25 = vector.load %arg3[%c0_21, %24, %c0_22, %c0_23] : memref<1x10x10x32xbf16, #tpu.memory_space<vmem>>, vector<1x4x8x32xbf16>
    %26 = vector.shape_cast %25 : vector<1x4x8x32xbf16> to vector<4x8x32xbf16>
    %27 = vector.shape_cast %26 : vector<4x8x32xbf16> to vector<32x32xbf16>
    %c0_24 = arith.constant 0 : index
    %c0_25 = arith.constant 0 : index
    %c1_26 = arith.constant 1 : index
    %c0_27 = arith.constant 0 : index
    %c0_28 = arith.constant 0 : index
    %c0_29 = arith.constant 0 : index
    %28 = vector.load %arg4[%c0_24, %c0_25, %c1_26, %c0_27, %c0_28, %c0_29] : memref<2x2x2x2x32x16xbf16, #tpu.memory_space<vmem>>, vector<1x1x1x1x32x16xbf16>
    %29 = vector.shape_cast %28 : vector<1x1x1x1x32x16xbf16> to vector<32x16xbf16>
    %cst_30 = arith.constant dense<0.000000e+00> : vector<32x16xf32>
    %30 = tpu.matmul %27, %29, %cst_30 {dimension_numbers = #tpu.dot_dimension_numbers<[1], [0], [0], [1], [0, 0, 1, 1], [], []>} : vector<32x32xbf16>, vector<32x16xbf16>, vector<32x16xf32> -> vector<32x16xf32>
    %31 = arith.addf %22, %30 : vector<32x16xf32>
    %c1_i32_31 = arith.constant 1 : i32
    %32 = arith.addi %0, %c1_i32_31 : i32
    %c0_32 = arith.constant 0 : index
    %33 = arith.index_cast %32 : i32 to index
    %c1_33 = arith.constant 1 : index
    %c0_34 = arith.constant 0 : index
    %34 = vector.load %arg3[%c0_32, %33, %c1_33, %c0_34] : memref<1x10x10x32xbf16, #tpu.memory_space<vmem>>, vector<1x4x8x32xbf16>
    %35 = vector.shape_cast %34 : vector<1x4x8x32xbf16> to vector<4x8x32xbf16>
    %36 = vector.shape_cast %35 : vector<4x8x32xbf16> to vector<32x32xbf16>
    %c0_35 = arith.constant 0 : index
    %c0_36 = arith.constant 0 : index
    %c1_37 = arith.constant 1 : index
    %c1_38 = arith.constant 1 : index
    %c0_39 = arith.constant 0 : index
    %c0_40 = arith.constant 0 : index
    %37 = vector.load %arg4[%c0_35, %c0_36, %c1_37, %c1_38, %c0_39, %c0_40] : memref<2x2x2x2x32x16xbf16, #tpu.memory_space<vmem>>, vector<1x1x1x1x32x16xbf16>
    %38 = vector.shape_cast %37 : vector<1x1x1x1x32x16xbf16> to vector<32x16xbf16>
    %cst_41 = arith.constant dense<0.000000e+00> : vector<32x16xf32>
    %39 = tpu.matmul %36, %38, %cst_41 {dimension_numbers = #tpu.dot_dimension_numbers<[1], [0], [0], [1], [0, 0, 1, 1], [], []>} : vector<32x32xbf16>, vector<32x16xbf16>, vector<32x16xf32> -> vector<32x16xf32>
    %40 = arith.addf %31, %39 : vector<32x16xf32>
    %c0_42 = arith.constant 0 : index
    %c1_43 = arith.constant 1 : index
    %c0_44 = arith.constant 0 : index
    %c0_45 = arith.constant 0 : index
    %c0_46 = arith.constant 0 : index
    %c0_47 = arith.constant 0 : index
    %41 = vector.load %arg4[%c0_42, %c1_43, %c0_44, %c0_45, %c0_46, %c0_47] : memref<2x2x2x2x32x16xbf16, #tpu.memory_space<vmem>>, vector<1x1x1x1x32x16xbf16>
    %42 = vector.shape_cast %41 : vector<1x1x1x1x32x16xbf16> to vector<32x16xbf16>
    %cst_48 = arith.constant dense<0.000000e+00> : vector<32x16xf32>
    %43 = tpu.matmul %18, %42, %cst_48 {dimension_numbers = #tpu.dot_dimension_numbers<[1], [0], [0], [1], [0, 0, 1, 1], [], []>} : vector<32x32xbf16>, vector<32x16xbf16>, vector<32x16xf32> -> vector<32x16xf32>
    %c0_i32_49 = arith.constant 0 : i32
    %44 = arith.addi %0, %c0_i32_49 : i32
    %c0_50 = arith.constant 0 : index
    %45 = arith.index_cast %44 : i32 to index
    %c2 = arith.constant 2 : index
    %c0_51 = arith.constant 0 : index
    %46 = vector.load %arg3[%c0_50, %45, %c2, %c0_51] : memref<1x10x10x32xbf16, #tpu.memory_space<vmem>>, vector<1x4x8x32xbf16>
    %47 = vector.shape_cast %46 : vector<1x4x8x32xbf16> to vector<4x8x32xbf16>
    %48 = vector.shape_cast %47 : vector<4x8x32xbf16> to vector<32x32xbf16>
    %c0_52 = arith.constant 0 : index
    %c1_53 = arith.constant 1 : index
    %c0_54 = arith.constant 0 : index
    %c1_55 = arith.constant 1 : index
    %c0_56 = arith.constant 0 : index
    %c0_57 = arith.constant 0 : index
    %49 = vector.load %arg4[%c0_52, %c1_53, %c0_54, %c1_55, %c0_56, %c0_57] : memref<2x2x2x2x32x16xbf16, #tpu.memory_space<vmem>>, vector<1x1x1x1x32x16xbf16>
    %50 = vector.shape_cast %49 : vector<1x1x1x1x32x16xbf16> to vector<32x16xbf16>
    %cst_58 = arith.constant dense<0.000000e+00> : vector<32x16xf32>
    %51 = tpu.matmul %48, %50, %cst_58 {dimension_numbers = #tpu.dot_dimension_numbers<[1], [0], [0], [1], [0, 0, 1, 1], [], []>} : vector<32x32xbf16>, vector<32x16xbf16>, vector<32x16xf32> -> vector<32x16xf32>
    %52 = arith.addf %43, %51 : vector<32x16xf32>
    %c0_59 = arith.constant 0 : index
    %c1_60 = arith.constant 1 : index
    %c1_61 = arith.constant 1 : index
    %c0_62 = arith.constant 0 : index
    %c0_63 = arith.constant 0 : index
    %c0_64 = arith.constant 0 : index
    %53 = vector.load %arg4[%c0_59, %c1_60, %c1_61, %c0_62, %c0_63, %c0_64] : memref<2x2x2x2x32x16xbf16, #tpu.memory_space<vmem>>, vector<1x1x1x1x32x16xbf16>
    %54 = vector.shape_cast %53 : vector<1x1x1x1x32x16xbf16> to vector<32x16xbf16>
    %cst_65 = arith.constant dense<0.000000e+00> : vector<32x16xf32>
    %55 = tpu.matmul %36, %54, %cst_65 {dimension_numbers = #tpu.dot_dimension_numbers<[1], [0], [0], [1], [0, 0, 1, 1], [], []>} : vector<32x32xbf16>, vector<32x16xbf16>, vector<32x16xf32> -> vector<32x16xf32>
    %56 = arith.addf %52, %55 : vector<32x16xf32>
    %c1_i32_66 = arith.constant 1 : i32
    %57 = arith.addi %0, %c1_i32_66 : i32
    %c0_67 = arith.constant 0 : index
    %58 = arith.index_cast %57 : i32 to index
    %c2_68 = arith.constant 2 : index
    %c0_69 = arith.constant 0 : index
    %59 = vector.load %arg3[%c0_67, %58, %c2_68, %c0_69] : memref<1x10x10x32xbf16, #tpu.memory_space<vmem>>, vector<1x4x8x32xbf16>
    %60 = vector.shape_cast %59 : vector<1x4x8x32xbf16> to vector<4x8x32xbf16>
    %61 = vector.shape_cast %60 : vector<4x8x32xbf16> to vector<32x32xbf16>
    %c0_70 = arith.constant 0 : index
    %c1_71 = arith.constant 1 : index
    %c1_72 = arith.constant 1 : index
    %c1_73 = arith.constant 1 : index
    %c0_74 = arith.constant 0 : index
    %c0_75 = arith.constant 0 : index
    %62 = vector.load %arg4[%c0_70, %c1_71, %c1_72, %c1_73, %c0_74, %c0_75] : memref<2x2x2x2x32x16xbf16, #tpu.memory_space<vmem>>, vector<1x1x1x1x32x16xbf16>
    %63 = vector.shape_cast %62 : vector<1x1x1x1x32x16xbf16> to vector<32x16xbf16>
    %cst_76 = arith.constant dense<0.000000e+00> : vector<32x16xf32>
    %64 = tpu.matmul %61, %63, %cst_76 {dimension_numbers = #tpu.dot_dimension_numbers<[1], [0], [0], [1], [0, 0, 1, 1], [], []>} : vector<32x32xbf16>, vector<32x16xbf16>, vector<32x16xf32> -> vector<32x16xf32>
    %65 = arith.addf %56, %64 : vector<32x16xf32>
    %c1_77 = arith.constant 1 : index
    %c0_78 = arith.constant 0 : index
    %c0_79 = arith.constant 0 : index
    %c0_80 = arith.constant 0 : index
    %c0_81 = arith.constant 0 : index
    %c0_82 = arith.constant 0 : index
    %66 = vector.load %arg4[%c1_77, %c0_78, %c0_79, %c0_80, %c0_81, %c0_82] : memref<2x2x2x2x32x16xbf16, #tpu.memory_space<vmem>>, vector<1x1x1x1x32x16xbf16>
    %67 = vector.shape_cast %66 : vector<1x1x1x1x32x16xbf16> to vector<32x16xbf16>
    %cst_83 = arith.constant dense<0.000000e+00> : vector<32x16xf32>
    %68 = tpu.matmul %27, %67, %cst_83 {dimension_numbers = #tpu.dot_dimension_numbers<[1], [0], [0], [1], [0, 0, 1, 1], [], []>} : vector<32x32xbf16>, vector<32x16xbf16>, vector<32x16xf32> -> vector<32x16xf32>
    %c1_84 = arith.constant 1 : index
    %c0_85 = arith.constant 0 : index
    %c0_86 = arith.constant 0 : index
    %c1_87 = arith.constant 1 : index
    %c0_88 = arith.constant 0 : index
    %c0_89 = arith.constant 0 : index
    %69 = vector.load %arg4[%c1_84, %c0_85, %c0_86, %c1_87, %c0_88, %c0_89] : memref<2x2x2x2x32x16xbf16, #tpu.memory_space<vmem>>, vector<1x1x1x1x32x16xbf16>
    %70 = vector.shape_cast %69 : vector<1x1x1x1x32x16xbf16> to vector<32x16xbf16>
    %cst_90 = arith.constant dense<0.000000e+00> : vector<32x16xf32>
    %71 = tpu.matmul %36, %70, %cst_90 {dimension_numbers = #tpu.dot_dimension_numbers<[1], [0], [0], [1], [0, 0, 1, 1], [], []>} : vector<32x32xbf16>, vector<32x16xbf16>, vector<32x16xf32> -> vector<32x16xf32>
    %72 = arith.addf %68, %71 : vector<32x16xf32>
    %c2_i32 = arith.constant 2 : i32
    %73 = arith.addi %0, %c2_i32 : i32
    %c0_91 = arith.constant 0 : index
    %74 = arith.index_cast %73 : i32 to index
    %c0_92 = arith.constant 0 : index
    %c0_93 = arith.constant 0 : index
    %75 = vector.load %arg3[%c0_91, %74, %c0_92, %c0_93] : memref<1x10x10x32xbf16, #tpu.memory_space<vmem>>, vector<1x4x8x32xbf16>
    %76 = vector.shape_cast %75 : vector<1x4x8x32xbf16> to vector<4x8x32xbf16>
    %77 = vector.shape_cast %76 : vector<4x8x32xbf16> to vector<32x32xbf16>
    %c1_94 = arith.constant 1 : index
    %c0_95 = arith.constant 0 : index
    %c1_96 = arith.constant 1 : index
    %c0_97 = arith.constant 0 : index
    %c0_98 = arith.constant 0 : index
    %c0_99 = arith.constant 0 : index
    %78 = vector.load %arg4[%c1_94, %c0_95, %c1_96, %c0_97, %c0_98, %c0_99] : memref<2x2x2x2x32x16xbf16, #tpu.memory_space<vmem>>, vector<1x1x1x1x32x16xbf16>
    %79 = vector.shape_cast %78 : vector<1x1x1x1x32x16xbf16> to vector<32x16xbf16>
    %cst_100 = arith.constant dense<0.000000e+00> : vector<32x16xf32>
    %80 = tpu.matmul %77, %79, %cst_100 {dimension_numbers = #tpu.dot_dimension_numbers<[1], [0], [0], [1], [0, 0, 1, 1], [], []>} : vector<32x32xbf16>, vector<32x16xbf16>, vector<32x16xf32> -> vector<32x16xf32>
    %81 = arith.addf %72, %80 : vector<32x16xf32>
    %c2_i32_101 = arith.constant 2 : i32
    %82 = arith.addi %0, %c2_i32_101 : i32
    %c0_102 = arith.constant 0 : index
    %83 = arith.index_cast %82 : i32 to index
    %c1_103 = arith.constant 1 : index
    %c0_104 = arith.constant 0 : index
    %84 = vector.load %arg3[%c0_102, %83, %c1_103, %c0_104] : memref<1x10x10x32xbf16, #tpu.memory_space<vmem>>, vector<1x4x8x32xbf16>
    %85 = vector.shape_cast %84 : vector<1x4x8x32xbf16> to vector<4x8x32xbf16>
    %86 = vector.shape_cast %85 : vector<4x8x32xbf16> to vector<32x32xbf16>
    %c1_105 = arith.constant 1 : index
    %c0_106 = arith.constant 0 : index
    %c1_107 = arith.constant 1 : index
    %c1_108 = arith.constant 1 : index
    %c0_109 = arith.constant 0 : index
    %c0_110 = arith.constant 0 : index
    %87 = vector.load %arg4[%c1_105, %c0_106, %c1_107, %c1_108, %c0_109, %c0_110] : memref<2x2x2x2x32x16xbf16, #tpu.memory_space<vmem>>, vector<1x1x1x1x32x16xbf16>
    %88 = vector.shape_cast %87 : vector<1x1x1x1x32x16xbf16> to vector<32x16xbf16>
    %cst_111 = arith.constant dense<0.000000e+00> : vector<32x16xf32>
    %89 = tpu.matmul %86, %88, %cst_111 {dimension_numbers = #tpu.dot_dimension_numbers<[1], [0], [0], [1], [0, 0, 1, 1], [], []>} : vector<32x32xbf16>, vector<32x16xbf16>, vector<32x16xf32> -> vector<32x16xf32>
    %90 = arith.addf %81, %89 : vector<32x16xf32>
    %c1_112 = arith.constant 1 : index
    %c1_113 = arith.constant 1 : index
    %c0_114 = arith.constant 0 : index
    %c0_115 = arith.constant 0 : index
    %c0_116 = arith.constant 0 : index
    %c0_117 = arith.constant 0 : index
    %91 = vector.load %arg4[%c1_112, %c1_113, %c0_114, %c0_115, %c0_116, %c0_117] : memref<2x2x2x2x32x16xbf16, #tpu.memory_space<vmem>>, vector<1x1x1x1x32x16xbf16>
    %92 = vector.shape_cast %91 : vector<1x1x1x1x32x16xbf16> to vector<32x16xbf16>
    %cst_118 = arith.constant dense<0.000000e+00> : vector<32x16xf32>
    %93 = tpu.matmul %36, %92, %cst_118 {dimension_numbers = #tpu.dot_dimension_numbers<[1], [0], [0], [1], [0, 0, 1, 1], [], []>} : vector<32x32xbf16>, vector<32x16xbf16>, vector<32x16xf32> -> vector<32x16xf32>
    %c1_119 = arith.constant 1 : index
    %c1_120 = arith.constant 1 : index
    %c0_121 = arith.constant 0 : index
    %c1_122 = arith.constant 1 : index
    %c0_123 = arith.constant 0 : index
    %c0_124 = arith.constant 0 : index
    %94 = vector.load %arg4[%c1_119, %c1_120, %c0_121, %c1_122, %c0_123, %c0_124] : memref<2x2x2x2x32x16xbf16, #tpu.memory_space<vmem>>, vector<1x1x1x1x32x16xbf16>
    %95 = vector.shape_cast %94 : vector<1x1x1x1x32x16xbf16> to vector<32x16xbf16>
    %cst_125 = arith.constant dense<0.000000e+00> : vector<32x16xf32>
    %96 = tpu.matmul %61, %95, %cst_125 {dimension_numbers = #tpu.dot_dimension_numbers<[1], [0], [0], [1], [0, 0, 1, 1], [], []>} : vector<32x32xbf16>, vector<32x16xbf16>, vector<32x16xf32> -> vector<32x16xf32>
    %97 = arith.addf %93, %96 : vector<32x16xf32>
    %c1_126 = arith.constant 1 : index
    %c1_127 = arith.constant 1 : index
    %c1_128 = arith.constant 1 : index
    %c0_129 = arith.constant 0 : index
    %c0_130 = arith.constant 0 : index
    %c0_131 = arith.constant 0 : index
    %98 = vector.load %arg4[%c1_126, %c1_127, %c1_128, %c0_129, %c0_130, %c0_131] : memref<2x2x2x2x32x16xbf16, #tpu.memory_space<vmem>>, vector<1x1x1x1x32x16xbf16>
    %99 = vector.shape_cast %98 : vector<1x1x1x1x32x16xbf16> to vector<32x16xbf16>
    %cst_132 = arith.constant dense<0.000000e+00> : vector<32x16xf32>
    %100 = tpu.matmul %86, %99, %cst_132 {dimension_numbers = #tpu.dot_dimension_numbers<[1], [0], [0], [1], [0, 0, 1, 1], [], []>} : vector<32x32xbf16>, vector<32x16xbf16>, vector<32x16xf32> -> vector<32x16xf32>
    %101 = arith.addf %97, %100 : vector<32x16xf32>
    %c2_i32_133 = arith.constant 2 : i32
    %102 = arith.addi %0, %c2_i32_133 : i32
    %c0_134 = arith.constant 0 : index
    %103 = arith.index_cast %102 : i32 to index
    %c2_135 = arith.constant 2 : index
    %c0_136 = arith.constant 0 : index
    %104 = vector.load %arg3[%c0_134, %103, %c2_135, %c0_136] : memref<1x10x10x32xbf16, #tpu.memory_space<vmem>>, vector<1x4x8x32xbf16>
    %105 = vector.shape_cast %104 : vector<1x4x8x32xbf16> to vector<4x8x32xbf16>
    %106 = vector.shape_cast %105 : vector<4x8x32xbf16> to vector<32x32xbf16>
    %c1_137 = arith.constant 1 : index
    %c1_138 = arith.constant 1 : index
    %c1_139 = arith.constant 1 : index
    %c1_140 = arith.constant 1 : index
    %c0_141 = arith.constant 0 : index
    %c0_142 = arith.constant 0 : index
    %107 = vector.load %arg4[%c1_137, %c1_138, %c1_139, %c1_140, %c0_141, %c0_142] : memref<2x2x2x2x32x16xbf16, #tpu.memory_space<vmem>>, vector<1x1x1x1x32x16xbf16>
    %108 = vector.shape_cast %107 : vector<1x1x1x1x32x16xbf16> to vector<32x16xbf16>
    %cst_143 = arith.constant dense<0.000000e+00> : vector<32x16xf32>
    %109 = tpu.matmul %106, %108, %cst_143 {dimension_numbers = #tpu.dot_dimension_numbers<[1], [0], [0], [1], [0, 0, 1, 1], [], []>} : vector<32x32xbf16>, vector<32x16xbf16>, vector<32x16xf32> -> vector<32x16xf32>
    %110 = arith.addf %101, %109 : vector<32x16xf32>
    %c0_i32_144 = arith.constant 0 : i32
    %111 = arith.cmpi eq, %arg1, %c0_i32_144 : i32
    %112 = arith.extui %111 : i1 to i32
    %c0_i32_145 = arith.constant 0 : i32
    %113 = arith.cmpi ne, %112, %c0_i32_145 : i32
    scf.if %113 {
      %cst_148 = arith.constant 0.000000e+00 : f32
      %117 = vector.broadcast %cst_148 : f32 to vector<1x16xf32>
      %cst_149 = arith.constant 0.000000e+00 : f32
      %118 = vector.broadcast %cst_149 : f32 to vector<1x16xf32>
      %cst_150 = arith.constant dense<0.000000e+00> : vector<16xf32>
      %119 = vector.multi_reduction <add>, %40, %cst_150 [0] : vector<32x16xf32> to vector<16xf32>
      %120 = vector.shape_cast %119 : vector<16xf32> to vector<1x16xf32>
      %121 = arith.addf %117, %120 : vector<1x16xf32>
      %122 = arith.mulf %40, %40 : vector<32x16xf32>
      %cst_151 = arith.constant dense<0.000000e+00> : vector<16xf32>
      %123 = vector.multi_reduction <add>, %122, %cst_151 [0] : vector<32x16xf32> to vector<16xf32>
      %124 = vector.shape_cast %123 : vector<16xf32> to vector<1x16xf32>
      %125 = arith.addf %118, %124 : vector<1x16xf32>
      %cst_152 = arith.constant dense<0.000000e+00> : vector<16xf32>
      %126 = vector.multi_reduction <add>, %65, %cst_152 [0] : vector<32x16xf32> to vector<16xf32>
      %127 = vector.shape_cast %126 : vector<16xf32> to vector<1x16xf32>
      %128 = arith.addf %121, %127 : vector<1x16xf32>
      %129 = arith.mulf %65, %65 : vector<32x16xf32>
      %cst_153 = arith.constant dense<0.000000e+00> : vector<16xf32>
      %130 = vector.multi_reduction <add>, %129, %cst_153 [0] : vector<32x16xf32> to vector<16xf32>
      %131 = vector.shape_cast %130 : vector<16xf32> to vector<1x16xf32>
      %132 = arith.addf %125, %131 : vector<1x16xf32>
      %cst_154 = arith.constant dense<0.000000e+00> : vector<16xf32>
      %133 = vector.multi_reduction <add>, %90, %cst_154 [0] : vector<32x16xf32> to vector<16xf32>
      %134 = vector.shape_cast %133 : vector<16xf32> to vector<1x16xf32>
      %135 = arith.addf %128, %134 : vector<1x16xf32>
      %136 = arith.mulf %90, %90 : vector<32x16xf32>
      %cst_155 = arith.constant dense<0.000000e+00> : vector<16xf32>
      %137 = vector.multi_reduction <add>, %136, %cst_155 [0] : vector<32x16xf32> to vector<16xf32>
      %138 = vector.shape_cast %137 : vector<16xf32> to vector<1x16xf32>
      %139 = arith.addf %132, %138 : vector<1x16xf32>
      %cst_156 = arith.constant dense<0.000000e+00> : vector<16xf32>
      %140 = vector.multi_reduction <add>, %110, %cst_156 [0] : vector<32x16xf32> to vector<16xf32>
      %141 = vector.shape_cast %140 : vector<16xf32> to vector<1x16xf32>
      %142 = arith.addf %135, %141 : vector<1x16xf32>
      %143 = arith.mulf %110, %110 : vector<32x16xf32>
      %cst_157 = arith.constant dense<0.000000e+00> : vector<16xf32>
      %144 = vector.multi_reduction <add>, %143, %cst_157 [0] : vector<32x16xf32> to vector<16xf32>
      %145 = vector.shape_cast %144 : vector<16xf32> to vector<1x16xf32>
      %146 = arith.addf %139, %145 : vector<1x16xf32>
      %c0_158 = arith.constant 0 : index
      %c0_159 = arith.constant 0 : index
      %147 = vector.load %arg6[%c0_158, %c0_159] : memref<1x16xf32, #tpu.memory_space<vmem>>, vector<1x16xf32>
      %148 = arith.addf %147, %142 : vector<1x16xf32>
      %c0_160 = arith.constant 0 : index
      %c0_161 = arith.constant 0 : index
      %149 = vector.load %arg6[%c0_160, %c0_161] : memref<1x16xf32, #tpu.memory_space<vmem>>, vector<1x16xf32>
      tpu.vector_store %arg6[%c0_160, %c0_161], %148 {strides = array<i32>} : memref<1x16xf32, #tpu.memory_space<vmem>>, vector<1x16xf32>,
      %c0_162 = arith.constant 0 : index
      %c0_163 = arith.constant 0 : index
      %150 = vector.load %arg7[%c0_162, %c0_163] : memref<1x16xf32, #tpu.memory_space<vmem>>, vector<1x16xf32>
      %151 = arith.addf %150, %146 : vector<1x16xf32>
      %c0_164 = arith.constant 0 : index
      %c0_165 = arith.constant 0 : index
      %152 = vector.load %arg7[%c0_164, %c0_165] : memref<1x16xf32, #tpu.memory_space<vmem>>, vector<1x16xf32>
      tpu.vector_store %arg7[%c0_164, %c0_165], %151 {strides = array<i32>} : memref<1x16xf32, #tpu.memory_space<vmem>>, vector<1x16xf32>,
    } else {
    }
    %c1_i32_146 = arith.constant 1 : i32
    %114 = arith.cmpi eq, %arg1, %c1_i32_146 : i32
    %115 = arith.extui %114 : i1 to i32
    %c0_i32_147 = arith.constant 0 : i32
    %116 = arith.cmpi ne, %115, %c0_i32_147 : i32
    scf.if %116 {
      %c0_148 = arith.constant 0 : index
      %c0_149 = arith.constant 0 : index
      %117 = vector.load %arg6[%c0_148, %c0_149] : memref<1x16xf32, #tpu.memory_space<vmem>>, vector<1x16xf32>
      %cst_150 = arith.constant 3.906250e-03 : f32
      %118 = vector.broadcast %cst_150 : f32 to vector<1x16xf32>
      %119 = arith.mulf %117, %118 : vector<1x16xf32>
      %c0_151 = arith.constant 0 : index
      %c0_152 = arith.constant 0 : index
      %120 = vector.load %arg7[%c0_151, %c0_152] : memref<1x16xf32, #tpu.memory_space<vmem>>, vector<1x16xf32>
      %cst_153 = arith.constant 3.906250e-03 : f32
      %121 = vector.broadcast %cst_153 : f32 to vector<1x16xf32>
      %122 = arith.mulf %120, %121 : vector<1x16xf32>
      %123 = arith.mulf %119, %119 : vector<1x16xf32>
      %124 = arith.subf %122, %123 : vector<1x16xf32>
      %cst_154 = arith.constant 0.000000e+00 : f32
      %125 = vector.broadcast %cst_154 : f32 to vector<1x16xf32>
      %126 = arith.maximumf %124, %125 : vector<1x16xf32>
      %cst_155 = arith.constant 9.99999974E-6 : f32
      %127 = vector.broadcast %cst_155 : f32 to vector<1x16xf32>
      %128 = arith.addf %126, %127 : vector<1x16xf32>
      %129 = math.rsqrt %128 : vector<1x16xf32>
      %130 = vector.broadcast %119 : vector<1x16xf32> to vector<32x16xf32>
      %131 = arith.subf %40, %130 : vector<32x16xf32>
      %132 = vector.broadcast %129 : vector<1x16xf32> to vector<32x16xf32>
      %133 = arith.mulf %131, %132 : vector<32x16xf32>
      %cst_156 = arith.constant 0.000000e+00 : f32
      %134 = vector.broadcast %cst_156 : f32 to vector<32x16xf32>
      %135 = arith.maximumf %133, %134 : vector<32x16xf32>
      %136 = vector.shape_cast %135 : vector<32x16xf32> to vector<4x8x16xf32>
      %137 = arith.truncf %136 : vector<4x8x16xf32> to vector<4x8x16xbf16>
      %c0_157 = arith.constant 0 : index
      %c0_158 = arith.constant 0 : index
      %c0_159 = arith.constant 0 : index
      %c0_160 = arith.constant 0 : index
      %c0_161 = arith.constant 0 : index
      %138 = vector.load %arg5[%c0_157, %c0_158, %c0_159, %c0_160, %c0_161] : memref<1x4x4x8x16xbf16, #tpu.memory_space<vmem>>, vector<1x1x4x8x16xbf16>
      %139 = vector.shape_cast %138 : vector<1x1x4x8x16xbf16> to vector<4x8x16xbf16>
      %140 = vector.shape_cast %137 : vector<4x8x16xbf16> to vector<1x1x4x8x16xbf16>
      tpu.vector_store %arg5[%c0_157, %c0_158, %c0_159, %c0_160, %c0_161], %140 {strides = array<i32>} : memref<1x4x4x8x16xbf16, #tpu.memory_space<vmem>>, vector<1x1x4x8x16xbf16>,
      %141 = vector.broadcast %119 : vector<1x16xf32> to vector<32x16xf32>
      %142 = arith.subf %65, %141 : vector<32x16xf32>
      %143 = vector.broadcast %129 : vector<1x16xf32> to vector<32x16xf32>
      %144 = arith.mulf %142, %143 : vector<32x16xf32>
      %cst_162 = arith.constant 0.000000e+00 : f32
      %145 = vector.broadcast %cst_162 : f32 to vector<32x16xf32>
      %146 = arith.maximumf %144, %145 : vector<32x16xf32>
      %147 = vector.shape_cast %146 : vector<32x16xf32> to vector<4x8x16xf32>
      %148 = arith.truncf %147 : vector<4x8x16xf32> to vector<4x8x16xbf16>
      %c0_163 = arith.constant 0 : index
      %c1_164 = arith.constant 1 : index
      %c0_165 = arith.constant 0 : index
      %c0_166 = arith.constant 0 : index
      %c0_167 = arith.constant 0 : index
      %149 = vector.load %arg5[%c0_163, %c1_164, %c0_165, %c0_166, %c0_167] : memref<1x4x4x8x16xbf16, #tpu.memory_space<vmem>>, vector<1x1x4x8x16xbf16>
      %150 = vector.shape_cast %149 : vector<1x1x4x8x16xbf16> to vector<4x8x16xbf16>
      %151 = vector.shape_cast %148 : vector<4x8x16xbf16> to vector<1x1x4x8x16xbf16>
      tpu.vector_store %arg5[%c0_163, %c1_164, %c0_165, %c0_166, %c0_167], %151 {strides = array<i32>} : memref<1x4x4x8x16xbf16, #tpu.memory_space<vmem>>, vector<1x1x4x8x16xbf16>,
      %152 = vector.broadcast %119 : vector<1x16xf32> to vector<32x16xf32>
      %153 = arith.subf %90, %152 : vector<32x16xf32>
      %154 = vector.broadcast %129 : vector<1x16xf32> to vector<32x16xf32>
      %155 = arith.mulf %153, %154 : vector<32x16xf32>
      %cst_168 = arith.constant 0.000000e+00 : f32
      %156 = vector.broadcast %cst_168 : f32 to vector<32x16xf32>
      %157 = arith.maximumf %155, %156 : vector<32x16xf32>
      %158 = vector.shape_cast %157 : vector<32x16xf32> to vector<4x8x16xf32>
      %159 = arith.truncf %158 : vector<4x8x16xf32> to vector<4x8x16xbf16>
      %c0_169 = arith.constant 0 : index
      %c2_170 = arith.constant 2 : index
      %c0_171 = arith.constant 0 : index
      %c0_172 = arith.constant 0 : index
      %c0_173 = arith.constant 0 : index
      %160 = vector.load %arg5[%c0_169, %c2_170, %c0_171, %c0_172, %c0_173] : memref<1x4x4x8x16xbf16, #tpu.memory_space<vmem>>, vector<1x1x4x8x16xbf16>
      %161 = vector.shape_cast %160 : vector<1x1x4x8x16xbf16> to vector<4x8x16xbf16>
      %162 = vector.shape_cast %159 : vector<4x8x16xbf16> to vector<1x1x4x8x16xbf16>
      tpu.vector_store %arg5[%c0_169, %c2_170, %c0_171, %c0_172, %c0_173], %162 {strides = array<i32>} : memref<1x4x4x8x16xbf16, #tpu.memory_space<vmem>>, vector<1x1x4x8x16xbf16>,
      %163 = vector.broadcast %119 : vector<1x16xf32> to vector<32x16xf32>
      %164 = arith.subf %110, %163 : vector<32x16xf32>
      %165 = vector.broadcast %129 : vector<1x16xf32> to vector<32x16xf32>
      %166 = arith.mulf %164, %165 : vector<32x16xf32>
      %cst_174 = arith.constant 0.000000e+00 : f32
      %167 = vector.broadcast %cst_174 : f32 to vector<32x16xf32>
      %168 = arith.maximumf %166, %167 : vector<32x16xf32>
      %169 = vector.shape_cast %168 : vector<32x16xf32> to vector<4x8x16xf32>
      %170 = arith.truncf %169 : vector<4x8x16xf32> to vector<4x8x16xbf16>
      %c0_175 = arith.constant 0 : index
      %c3 = arith.constant 3 : index
      %c0_176 = arith.constant 0 : index
      %c0_177 = arith.constant 0 : index
      %c0_178 = arith.constant 0 : index
      %171 = vector.load %arg5[%c0_175, %c3, %c0_176, %c0_177, %c0_178] : memref<1x4x4x8x16xbf16, #tpu.memory_space<vmem>>, vector<1x1x4x8x16xbf16>
      %172 = vector.shape_cast %171 : vector<1x1x4x8x16xbf16> to vector<4x8x16xbf16>
      %173 = vector.shape_cast %170 : vector<4x8x16xbf16> to vector<1x1x4x8x16xbf16>
      tpu.vector_store %arg5[%c0_175, %c3, %c0_176, %c0_177, %c0_178], %173 {strides = array<i32>} : memref<1x4x4x8x16xbf16, #tpu.memory_space<vmem>>, vector<1x1x4x8x16xbf16>,
    } else {
    }
    return
  }
  func.func @transform_0(%arg0: i32, %arg1: i32, %arg2: i32) -> (i32, i32, i32, i32) {
    %c0_i32 = arith.constant 0 : i32
    %c0_i32_0 = arith.constant 0 : i32
    %c0_i32_1 = arith.constant 0 : i32
    %c0_i32_2 = arith.constant 0 : i32
    return %arg0, %c0_i32, %c0_i32_0, %c0_i32_1 : i32, i32, i32, i32
  }
  func.func @transform_1(%arg0: i32, %arg1: i32, %arg2: i32) -> (i32, i32, i32, i32, i32, i32) {
    %c0_i32 = arith.constant 0 : i32
    %c0_i32_0 = arith.constant 0 : i32
    %c0_i32_1 = arith.constant 0 : i32
    %c0_i32_2 = arith.constant 0 : i32
    %c0_i32_3 = arith.constant 0 : i32
    %c0_i32_4 = arith.constant 0 : i32
    %c0_i32_5 = arith.constant 0 : i32
    return %c0_i32, %c0_i32_0, %c0_i32_1, %c0_i32_2, %c0_i32_3, %c0_i32_4 : i32, i32, i32, i32, i32, i32
  }
  func.func @transform_2(%arg0: i32, %arg1: i32, %arg2: i32) -> (i32, i32, i32, i32, i32) {
    %0 = arith.muli %arg2, %arg1 : i32
    %c0_i32 = arith.constant 0 : i32
    %c0_i32_0 = arith.constant 0 : i32
    %c0_i32_1 = arith.constant 0 : i32
    %c0_i32_2 = arith.constant 0 : i32
    return %arg0, %c0_i32, %0, %c0_i32_0, %c0_i32_1 : i32, i32, i32, i32, i32
  }
}

</mosaic_0001>

<llo_original>
// kernel: unet_up_forward.1
$region0: #{unet_up_forward.1}
  #allocation0 [shape = 'u32[]', space=smem, size = 0x4, offset = 0x4, fixed_abs, tag = 'smem constant byte address 0x4 - core index']
  #allocation1 [shape = 'u32[144,128]{1,0:T(1,128)}', space=vmem, size = 0x12000, scoped, tag = 'internal scratch']
  #allocation2 [shape = 'f32[1,16]{1,0:T(1,128)}', space=vmem, size = 0x200, scoped, tag = 'scratch operand']
  #allocation3 [shape = 'f32[1,16]{1,0:T(1,128)}', space=vmem, size = 0x200, scoped, tag = 'scratch operand']
  %s0 = inlined_call_operand.vmem [shape: bf16[2,10,10,32], index: 0, kind: input, shape index: {}]
  %s1 = inlined_call_operand.vmem [shape: bf16[2,2,2,2,32,16], index: 1, kind: input, shape index: {}]
  %s2 = inlined_call_operand.vmem [shape: bf16[2,4,8,8,16], index: 2, kind: output, shape index: {}]
  %s3 = sld [smem:[#allocation0]]
  $region90: #{unet_up_forward.1} parent=0
    _
  %s5 = ssub.s32 1, %s3
  %s6 = scalar_select 0, %s5, %s3
  $region1: #{unet_up_forward.1} parent=0
    #allocation4 [shape = 'u8[65536]{0}', space=vmem, size = 0x10000, scoped, tag = 'output window, operand 0']
    loop: start=0, step=1, limit=10
    $region2: #{unet_up_forward.1} parent=1 // loop_pre_header
      _
    $region3: #{unet_up_forward.1} parent=1 // loop_header
      %s8 = sphi 0, %s12
      %p9 = scmp.ge.s32.totalorder %s8, 10
      %s15 = sphi 0, %s34
      %s16 = sphi 0, %s30
      %s17 = sphi 0, %s26
      %s18 = sphi 0, %s15
      %s19 = sphi 0, %s16
      %s20 = sphi 0, %s17
      %s21 = sphi 0, %s18
      %s22 = sphi 0, %s19
      %s23 = sphi 0, %s20
      %s37 = sphi 0, %s39
      %s40 = sphi 0, %s37
      %s41 = sphi 0, %s40
      %s57 = sphi 0, %s41
      %s61 = sphi 0, %s61
      %s63 = sphi 0, %s61
      %s64 = sphi 0, %s63
      %s78 = sphi 0, %s64
      %s88 = sphi 0, %s90
      %s91 = sphi 0, %s88
      %s92 = sphi 0, %s91
      %s108 = sphi 0, %s92
    $region4: #{unet_up_forward.1} parent=1 // loop_header_branch
      %11 = sbr.rel (%p9) target = $region8
    $region5: #{unet_up_forward.1} parent=1 // loop_body
      %s13 = ssub.s32 %s8, 1
      %s14 = ssub.s32 %s8, 2
      %s24 = sadd.s32 1, %s17
      %p25 = scmp.ge.s32.totalorder %s24, 2
      %s26 = scalar_select %p25, 0, %s24
      %s27 = sadd.s32 1, %s16
      %s28 = scalar_select %p25, %s27, %s16
      %p29 = scmp.ge.s32.totalorder %s28, 2
      %s30 = scalar_select %p29, 0, %s28
      %s31 = sadd.s32 1, %s15
      %s32 = scalar_select %p29, %s31, %s15
      %p33 = scmp.ge.s32.totalorder %s32, 2
      %s34 = scalar_select %p33, 0, %s32
      %s35 = ssub.s32 %s15, %s34
      %p36 = scmp.eq.s32.totalorder %s35, 0
      %s38 = sadd.s32 %s37, 1
      %s39 = scalar_select %p36, %s37, %s38
      %p42 = pneg %p36
      %p43 = scmp.eq.s32.totalorder %s8, 7
      %p44 = por %p42, %p43
      %p45 = scmp.ne.s32.totalorder %s37, %s40
      %p46 = scmp.eq.s32.totalorder %s8, 0
      %p47 = por %p45, %p46
      %p48 = scmp.ne.s32.totalorder %s37, %s40
      %p49 = scmp.eq.s32.totalorder %s13, 7
      %p50 = por %p48, %p49
      %p51 = scmp.ne.s32.totalorder %s40, %s41
      %p52 = scmp.eq.s32.totalorder %s13, 0
      %p53 = por %p51, %p52
      %p54 = scmp.ne.s32.totalorder %s40, %s41
      %p55 = scmp.eq.s32.totalorder %s14, 7
      %p56 = por %p54, %p55
      %p58 = scmp.ne.s32.totalorder %s41, %s57
      %p59 = scmp.eq.s32.totalorder %s14, 0
      %p60 = por %p58, %p59
      %s62 = sadd.s32 %s61, 1
      %p65 = scmp.eq.s32.totalorder %s8, 7
      %p66 = scmp.ne.s32.totalorder %s61, %s63
      %p67 = scmp.eq.s32.totalorder %s8, 0
      %p68 = por %p66, %p67
      %p69 = scmp.ne.s32.totalorder %s61, %s63
      %p70 = scmp.eq.s32.totalorder %s13, 7
      %p71 = por %p69, %p70
      %p72 = scmp.ne.s32.totalorder %s63, %s64
      %p73 = scmp.eq.s32.totalorder %s13, 0
      %p74 = por %p72, %p73
      %p75 = scmp.ne.s32.totalorder %s63, %s64
      %p76 = scmp.eq.s32.totalorder %s14, 7
      %p77 = por %p75, %p76
      %p79 = scmp.ne.s32.totalorder %s64, %s78
      %p80 = scmp.eq.s32.totalorder %s14, 0
      %p81 = por %p79, %p80
      %s82 = smul.u32 %s17, %s16
      %s83 = smul.u32 %s26, %s30
      %s84 = ssub.s32 %s15, %s34
      %s85 = ssub.s32 %s82, %s83
      %s86 = sor.u32 %s84, %s85
      %p87 = scmp.eq.s32.totalorder %s86, 0
      %s89 = sadd.s32 %s88, 1
      %s90 = scalar_select %p87, %s88, %s89
      %p93 = pneg %p87
      %p94 = scmp.eq.s32.totalorder %s8, 7
      %p95 = por %p93, %p94
      %p96 = scmp.ne.s32.totalorder %s88, %s91
      %p97 = scmp.eq.s32.totalorder %s8, 0
      %p98 = por %p96, %p97
      %p99 = scmp.ne.s32.totalorder %s88, %s91
      %p100 = scmp.eq.s32.totalorder %s13, 7
      %p101 = por %p99, %p100
      %p102 = scmp.ne.s32.totalorder %s91, %s92
      %p103 = scmp.eq.s32.totalorder %s13, 0
      %p104 = por %p102, %p103
      %p105 = scmp.ne.s32.totalorder %s91, %s92
      %p106 = scmp.eq.s32.totalorder %s14, 7
      %p107 = por %p105, %p106
      %p109 = scmp.ne.s32.totalorder %s92, %s108
      %p110 = scmp.eq.s32.totalorder %s14, 0
      %p111 = por %p109, %p110
      %p112 = scmp.le.s32.totalorder 1, %s8
      %p113 = scmp.lt.s32.totalorder %s8, 9
      %p114 = pnand %p112, %p113
      %p115 = pneg %p114
      // Predicated region
      $region9: #{unet_up_forward.1} parent=5 // pred_check
        _
      $region10: #{unet_up_forward.1} parent=5 // pred_check_branch
        %117 = sbr.rel (%p114) target = $region12
      $region11: #{unet_up_forward.1} parent=5 // pred_region
        %s118 = ssub.s32 %s8, 1
        // Predicated region
        $region13: #{unet_up_forward.1} parent=11 // pred_check
          %p119 = pneg %p74
        $region14: #{unet_up_forward.1} parent=11 // pred_check_branch
          %121 = sbr.rel (%p119) target = $region16
        $region15: #{unet_up_forward.1} parent=11 // pred_region
          _
        $region16: #{unet_up_forward.1} parent=11 // pred_fallthru
          _
      $region12: #{unet_up_forward.1} parent=5 // pred_fallthru
        _
      %p122 = scmp.lt.s32.totalorder %s8, 8
      // Predicated region
      $region17: #{unet_up_forward.1} parent=5 // pred_check
        %p123 = pneg %p122
      $region18: #{unet_up_forward.1} parent=5 // pred_check_branch
        %125 = sbr.rel (%p123) target = $region20
      $region19: #{unet_up_forward.1} parent=5 // pred_region
        // Predicated region
        $region21: #{unet_up_forward.1} parent=19 // pred_check
          %p126 = pneg %p47
        $region22: #{unet_up_forward.1} parent=19 // pred_check_branch
          %128 = sbr.rel (%p126) target = $region24
        $region23: #{unet_up_forward.1} parent=19 // pred_region
          %p129 = scmp.lt.s32.totalorder %s15, 1
          %s130 = scalar_select %p129, %s15, 1
          %s131 = smul.addr %s130, 20
          %s132 = smul.addr %s131, 4
          %s133 = scalar_lea.vmem %s0, %s132
        $region24: #{unet_up_forward.1} parent=19 // pred_fallthru
          _
      $region20: #{unet_up_forward.1} parent=5 // pred_fallthru
        _
      %p134 = scmp.le.s32.totalorder 1, %s8
      %p135 = scmp.lt.s32.totalorder %s8, 9
      %p136 = pnand %p134, %p135
      %p137 = pneg %p136
      // Predicated region
      $region25: #{unet_up_forward.1} parent=5 // pred_check
        _
      $region26: #{unet_up_forward.1} parent=5 // pred_check_branch
        %139 = sbr.rel (%p136) target = $region28
      $region27: #{unet_up_forward.1} parent=5 // pred_region
        %s140 = ssub.s32 %s8, 1
        %p141 = scmp.lt.s32.totalorder %s18, 1
        %s142 = scalar_select %p141, %s18, 1
        %s143 = smul.addr %s142, 20
        %s144 = smul.addr %s143, 4
        %s145 = scalar_lea.vmem %s0, %s144
        %p146 = pneg %p53
        %p147 = pneg %p50
        %p148 = pneg %p74
        %p149 = pneg %p71
        %p150 = pneg %p104
        %p151 = pneg %p101
        %s152 = sand.u32 %s91, 1
        %s153 = sand.u32 %s91, 1
        %s154 = smul.addr %s153, 64
        %s155 = scalar_lea.vmem [#allocation4], %s154
        %p156 = scmp.lt.s32.totalorder %s18, 1
        %s157 = scalar_select %p156, %s18, 1
        %s158 = smul.addr %s157, 20
        %s159 = smul.addr %s158, 4
        %s160 = scalar_lea.vmem %s0, %s159
        %s161 = smul.u32 %s20, %s19
        %s162 = smul.u32 4, %s161
        %s164 = smul.u32 %s20, 4
        %p165 = scmp.eq.s32.totalorder %s19, 0
        %p166 = scmp.eq.s32.totalorder %s20, 0
        %p167 = pnand %p165, %p166
        %p168 = pneg %p167
        // Predicated region
        $region29: #{unet_up_forward.1} parent=27 // pred_check
          _
        $region30: #{unet_up_forward.1} parent=27 // pred_check_branch
          %170 = sbr.rel (%p167) target = $region32
        $region31: #{unet_up_forward.1} parent=27 // pred_region
          %vm171 = vcmask 122880
          %172 = vst.msk [vmem:[#allocation2] sm:$0x1] %vm171, 0.0
          %173 = vst.msk [vmem:[#allocation3] sm:$0x1] %vm171, 0.0
        $region32: #{unet_up_forward.1} parent=27 // pred_fallthru
          _
        %s174 = smul.u32 %s164, 2
        %s175 = smul.addr %s174, 4
        %s176 = scalar_lea.vmem %s160, %s175
        %v177 = vld [vmem:[%s176] sm:$0xf]
        %v178 = vld [vmem:[%s176 + $0x8] sm:$0xf]
        %v179 = vld [vmem:[%s176 + $0x10] sm:$0xf]
        %v180 = vld [vmem:[%s176 + $0x18] sm:$0xf]
        %v181 = vld [vmem:[%s1] sm:$0xf]
        %v182 = vld [vmem:[%s1 + $0x4] sm:$0xf]
        %v183 = vld [vmem:[%s1 + $0x8] sm:$0xf]
        %v184 = vld [vmem:[%s1 + $0xc] sm:$0xf]
        %v185 = vld [vmem:[%s176 + $0x4] sm:$0x1]
        %v186 = vld [vmem:[%s176 + $0xc] sm:$0x1]
        %v187 = vld [vmem:[%s176 + $0x14] sm:$0x1]
        %v188 = vld [vmem:[%s176 + $0x1c] sm:$0x1]
        %vm189 = vsmask.f32 3328
        %vm190 = vsmask.f32 7440
        %vm191 = vmor %vm189, %vm190
        %v193 = vshrl.u32 %v177, 16
        %v195 = vrot.slane %v193, 4
        %v196 = vshll.u32 %v177, 16
        %v198 = vrot.slane %v196, 5
        %v199 = vor.u32 %v195, %v198
        %v200 = vrot.slane %v199, 4
        %v202 = vshll.u32 %v185, 16
        %v204 = vrot.slane %v202, 5
        %v205 = vsel %vm191, %v200, %v204
        %v207 = vshrl.u32 %v178, 16
        %v209 = vrot.slane %v207, 4
        %v210 = vshll.u32 %v178, 16
        %v212 = vrot.slane %v210, 5
        %v213 = vor.u32 %v209, %v212
        %v214 = vrot.slane %v213, 4
        %v216 = vshll.u32 %v186, 16
        %v218 = vrot.slane %v216, 5
        %v219 = vsel %vm191, %v214, %v218
        %v221 = vshrl.u32 %v179, 16
        %v223 = vrot.slane %v221, 4
        %v224 = vshll.u32 %v179, 16
        %v226 = vrot.slane %v224, 5
        %v227 = vor.u32 %v223, %v226
        %v228 = vrot.slane %v227, 4
        %v230 = vshll.u32 %v187, 16
        %v232 = vrot.slane %v230, 5
        %v233 = vsel %vm191, %v228, %v232
        %v235 = vshrl.u32 %v180, 16
        %v237 = vrot.slane %v235, 4
        %v238 = vshll.u32 %v180, 16
        %v240 = vrot.slane %v238, 5
        %v241 = vor.u32 %v237, %v240
        %v242 = vrot.slane %v241, 4
        %v244 = vshll.u32 %v188, 16
        %v246 = vrot.slane %v244, 5
        %v247 = vsel %vm191, %v242, %v246
        %s248 = scalar_lea.vmem %s1, 16
        %v249 = vld [vmem:[%s248] sm:$0xf]
        %v250 = vld [vmem:[%s248 + $0x4] sm:$0xf]
        %v251 = vld [vmem:[%s248 + $0x8] sm:$0xf]
        %v252 = vld [vmem:[%s248 + $0xc] sm:$0xf]
        %v253 = vunpack.c.l.b16 %v205
        %v254 = vunpack.c.l.b16 %v219
        %v255 = vunpack.c.l.b16 %v233
        %v256 = vunpack.c.l.b16 %v247
        %v257 = vpack.c.b16 %v254, %v253
        %v258 = vpack.c.b16 %v256, %v255
        %v263 = vunpack.c.l.b16 %v249
        %v264 = vunpack.c.l.b16 %v250
        %v265 = vunpack.c.l.b16 %v251
        %v266 = vunpack.c.l.b16 %v252
        %v267 = vpack.c.b16 %v264, %v263
        %v268 = vpack.c.b16 %v266, %v265
        %vm271 = vcmask 261120
        %v273 = vsel %vm271, %v257, 0
        %v276 = vsel %vm271, %v258, 0
        %278 = vmatprep.subr.bf16.mxu0 0
        %279 = vmatpush1.bf16.msra.mxu0 %v267
        %280 = vmatprep.subr.bf16.mxu0 0
        %281 = vmatpush1.bf16.msra.mxu0 %v268
        %282 = vmatprep.subr.bf16.mxu0 0
        %283 = vmatpush1.bf16.msra.mxu0 0
        %284 = vmatprep.subr.bf16.mxu0 0
        %285 = vmatpush1.bf16.msra.mxu0 0
        %286 = vmatprep.subr.bf16.mxu0 0
        %287 = vmatpush1.bf16.msra.mxu0 0
        %288 = vmatprep.subr.bf16.mxu0 0
        %289 = vmatpush1.bf16.msra.mxu0 0
        %290 = vmatprep.subr.bf16.mxu0 0
        %291 = vmatpush1.bf16.msra.mxu0 0
        %292 = vmatprep.subr.bf16.mxu0 0
        %293 = vmatpush1.bf16.msra.mxu0 0
        %294 = vmatprep.subr.bf16.mxu0 0
        %295 = vmatpush1.bf16.msra.mxu0 0
        %296 = vmatprep.subr.bf16.mxu0 0
        %297 = vmatpush1.bf16.msra.mxu0 0
        %298 = vmatprep.subr.bf16.mxu0 0
        %299 = vmatpush1.bf16.msra.mxu0 0
        %300 = vmatprep.subr.bf16.mxu0 0
        %301 = vmatpush1.bf16.msra.mxu0 0
        %302 = vmatprep.subr.bf16.mxu0 0
        %303 = vmatpush1.bf16.msra.mxu0 0
        %304 = vmatprep.subr.bf16.mxu0 0
        %305 = vmatpush1.bf16.msra.mxu0 0
        %306 = vmatprep.subr.bf16.mxu0 0
        %307 = vmatpush1.bf16.msra.mxu0 0
        %308 = vmatprep.subr.bf16.mxu0 0
        %309 = vmatpush1.bf16.msra.mxu0 0
        %310 = vmatprep.mubr.bf16.mxu0 0
        %311 = vmatmul.mubr.bf16.gmra.mrb[0].mxu0 %v273
        %v312 = vpop.f32.mrb[0].mxu0
        %v313 = vadd.f32 0.0, %v312
        %v314 = vpop.f32.mrb[0].mxu0
        %v315 = vpop.f32.mrb[0].mxu0
        %v316 = vadd.f32 0.0, %v315
        %v317 = vpop.f32.mrb[0].mxu0
        %318 = vmatprep.mubr.bf16.mxu0 0
        %319 = vmatmul.mubr.bf16.gmra.mrb[0].mxu0 %v276
        %v320 = vpop.f32.mrb[0].mxu0
        %v321 = vadd.f32 0.0, %v320
        %v322 = vpop.f32.mrb[0].mxu0
        %v323 = vpop.f32.mrb[0].mxu0
        %v324 = vadd.f32 0.0, %v323
        %v325 = vpop.f32.mrb[0].mxu0
        %326 = vdwg.mxu0
        %v331 = vunpack.c.l.b16 %v177
        %v332 = vunpack.c.l.b16 %v178
        %v333 = vunpack.c.l.b16 %v179
        %v334 = vunpack.c.l.b16 %v180
        %v335 = vpack.c.b16 %v332, %v331
        %v336 = vpack.c.b16 %v334, %v333
        %v341 = vunpack.c.l.b16 %v181
        %v342 = vunpack.c.l.b16 %v182
        %v343 = vunpack.c.l.b16 %v183
        %v344 = vunpack.c.l.b16 %v184
        %v345 = vpack.c.b16 %v342, %v341
        %v346 = vpack.c.b16 %v344, %v343
        %v350 = vsel %vm271, %v335, 0
        %v353 = vsel %vm271, %v336, 0
        %355 = vmatprep.subr.bf16.mxu0 0
        %356 = vmatpush1.bf16.msra.mxu0 %v345
        %357 = vmatprep.subr.bf16.mxu0 0
        %358 = vmatpush1.bf16.msra.mxu0 %v346
        %359 = vmatprep.subr.bf16.mxu0 0
        %360 = vmatpush1.bf16.msra.mxu0 0
        %361 = vmatprep.subr.bf16.mxu0 0
        %362 = vmatpush1.bf16.msra.mxu0 0
        %363 = vmatprep.subr.bf16.mxu0 0
        %364 = vmatpush1.bf16.msra.mxu0 0
        %365 = vmatprep.subr.bf16.mxu0 0
        %366 = vmatpush1.bf16.msra.mxu0 0
        %367 = vmatprep.subr.bf16.mxu0 0
        %368 = vmatpush1.bf16.msra.mxu0 0
        %369 = vmatprep.subr.bf16.mxu0 0
        %370 = vmatpush1.bf16.msra.mxu0 0
        %371 = vmatprep.subr.bf16.mxu0 0
        %372 = vmatpush1.bf16.msra.mxu0 0
        %373 = vmatprep.subr.bf16.mxu0 0
        %374 = vmatpush1.bf16.msra.mxu0 0
        %375 = vmatprep.subr.bf16.mxu0 0
        %376 = vmatpush1.bf16.msra.mxu0 0
        %377 = vmatprep.subr.bf16.mxu0 0
        %378 = vmatpush1.bf16.msra.mxu0 0
        %379 = vmatprep.subr.bf16.mxu0 0
        %380 = vmatpush1.bf16.msra.mxu0 0
        %381 = vmatprep.subr.bf16.mxu0 0
        %382 = vmatpush1.bf16.msra.mxu0 0
        %383 = vmatprep.subr.bf16.mxu0 0
        %384 = vmatpush1.bf16.msra.mxu0 0
        %385 = vmatprep.subr.bf16.mxu0 0
        %386 = vmatpush1.bf16.msra.mxu0 0
        %387 = vmatprep.mubr.bf16.mxu0 0
        %388 = vmatmul.mubr.bf16.gmra.mrb[0].mxu0 %v350
        %v389 = vpop.f32.mrb[0].mxu0
        %v390 = vadd.f32 %v313, %v389
        %v391 = vpop.f32.mrb[0].mxu0
        %v392 = vpop.f32.mrb[0].mxu0
        %v393 = vadd.f32 %v316, %v392
        %v394 = vpop.f32.mrb[0].mxu0
        %395 = vmatprep.mubr.bf16.mxu0 0
        %396 = vmatmul.mubr.bf16.gmra.mrb[0].mxu0 %v353
        %v397 = vpop.f32.mrb[0].mxu0
        %v398 = vadd.f32 %v321, %v397
        %v399 = vpop.f32.mrb[0].mxu0
        %v400 = vpop.f32.mrb[0].mxu0
        %v401 = vadd.f32 %v324, %v400
        %v402 = vpop.f32.mrb[0].mxu0
        %403 = vdwg.mxu0
        %s404 = sadd.s32 %s164, 1
        %s405 = smul.u32 %s404, 2
        %s406 = smul.addr %s405, 4
        %s407 = scalar_lea.vmem %s160, %s406
        %v408 = vld [vmem:[%s407] sm:$0xf]
        %v409 = vld [vmem:[%s407 + $0x8] sm:$0xf]
        %v410 = vld [vmem:[%s407 + $0x10] sm:$0xf]
        %v411 = vld [vmem:[%s407 + $0x18] sm:$0xf]
        %s412 = scalar_lea.vmem %s1, 32
        %v413 = vld [vmem:[%s412] sm:$0xf]
        %v414 = vld [vmem:[%s412 + $0x4] sm:$0xf]
        %v415 = vld [vmem:[%s412 + $0x8] sm:$0xf]
        %v416 = vld [vmem:[%s412 + $0xc] sm:$0xf]
        %v421 = vunpack.c.l.b16 %v408
        %v422 = vunpack.c.l.b16 %v409
        %v423 = vunpack.c.l.b16 %v410
        %v424 = vunpack.c.l.b16 %v411
        %v425 = vpack.c.b16 %v422, %v421
        %v426 = vpack.c.b16 %v424, %v423
        %v431 = vunpack.c.l.b16 %v413
        %v432 = vunpack.c.l.b16 %v414
        %v433 = vunpack.c.l.b16 %v415
        %v434 = vunpack.c.l.b16 %v416
        %v435 = vpack.c.b16 %v432, %v431
        %v436 = vpack.c.b16 %v434, %v433
        %v440 = vsel %vm271, %v425, 0
        %v443 = vsel %vm271, %v426, 0
        %445 = vmatprep.subr.bf16.mxu0 0
        %446 = vmatpush1.bf16.msra.mxu0 %v435
        %447 = vmatprep.subr.bf16.mxu0 0
        %448 = vmatpush1.bf16.msra.mxu0 %v436
        %449 = vmatprep.subr.bf16.mxu0 0
        %450 = vmatpush1.bf16.msra.mxu0 0
        %451 = vmatprep.subr.bf16.mxu0 0
        %452 = vmatpush1.bf16.msra.mxu0 0
        %453 = vmatprep.subr.bf16.mxu0 0
        %454 = vmatpush1.bf16.msra.mxu0 0
        %455 = vmatprep.subr.bf16.mxu0 0
        %456 = vmatpush1.bf16.msra.mxu0 0
        %457 = vmatprep.subr.bf16.mxu0 0
        %458 = vmatpush1.bf16.msra.mxu0 0
        %459 = vmatprep.subr.bf16.mxu0 0
        %460 = vmatpush1.bf16.msra.mxu0 0
        %461 = vmatprep.subr.bf16.mxu0 0
        %462 = vmatpush1.bf16.msra.mxu0 0
        %463 = vmatprep.subr.bf16.mxu0 0
        %464 = vmatpush1.bf16.msra.mxu0 0
        %465 = vmatprep.subr.bf16.mxu0 0
        %466 = vmatpush1.bf16.msra.mxu0 0
        %467 = vmatprep.subr.bf16.mxu0 0
        %468 = vmatpush1.bf16.msra.mxu0 0
        %469 = vmatprep.subr.bf16.mxu0 0
        %470 = vmatpush1.bf16.msra.mxu0 0
        %471 = vmatprep.subr.bf16.mxu0 0
        %472 = vmatpush1.bf16.msra.mxu0 0
        %473 = vmatprep.subr.bf16.mxu0 0
        %474 = vmatpush1.bf16.msra.mxu0 0
        %475 = vmatprep.subr.bf16.mxu0 0
        %476 = vmatpush1.bf16.msra.mxu0 0
        %477 = vmatprep.mubr.bf16.mxu0 0
        %478 = vmatmul.mubr.bf16.gmra.mrb[0].mxu0 %v440
        %v479 = vpop.f32.mrb[0].mxu0
        %v480 = vadd.f32 0.0, %v479
        %v481 = vpop.f32.mrb[0].mxu0
        %v482 = vpop.f32.mrb[0].mxu0
        %v483 = vadd.f32 0.0, %v482
        %v484 = vpop.f32.mrb[0].mxu0
        %485 = vmatprep.mubr.bf16.mxu0 0
        %486 = vmatmul.mubr.bf16.gmra.mrb[0].mxu0 %v443
        %v487 = vpop.f32.mrb[0].mxu0
        %v488 = vadd.f32 0.0, %v487
        %v489 = vpop.f32.mrb[0].mxu0
        %v490 = vpop.f32.mrb[0].mxu0
        %v491 = vadd.f32 0.0, %v490
        %v492 = vpop.f32.mrb[0].mxu0
        %493 = vdwg.mxu0
        %v494 = vadd.f32 %v390, %v480
        %v495 = vadd.f32 %v393, %v483
        %v496 = vadd.f32 %v398, %v488
        %v497 = vadd.f32 %v401, %v491
        %v498 = vld [vmem:[%s407] sm:$0xf]
        %v499 = vld [vmem:[%s407 + $0x4] sm:$0x1]
        %v500 = vld [vmem:[%s407 + $0x8] sm:$0xf]
        %v501 = vld [vmem:[%s407 + $0xc] sm:$0x1]
        %v502 = vld [vmem:[%s407 + $0x10] sm:$0xf]
        %v503 = vld [vmem:[%s407 + $0x14] sm:$0x1]
        %v504 = vld [vmem:[%s407 + $0x18] sm:$0xf]
        %v505 = vld [vmem:[%s407 + $0x1c] sm:$0x1]
        %v507 = vshrl.u32 %v498, 16
        %v509 = vrot.slane %v507, 4
        %v510 = vshll.u32 %v498, 16
        %v512 = vrot.slane %v510, 5
        %v513 = vor.u32 %v509, %v512
        %v514 = vrot.slane %v513, 4
        %v516 = vshll.u32 %v499, 16
        %v518 = vrot.slane %v516, 5
        %v519 = vsel %vm191, %v514, %v518
        %v521 = vshrl.u32 %v500, 16
        %v523 = vrot.slane %v521, 4
        %v524 = vshll.u32 %v500, 16
        %v526 = vrot.slane %v524, 5
        %v527 = vor.u32 %v523, %v526
        %v528 = vrot.slane %v527, 4
        %v530 = vshll.u32 %v501, 16
        %v532 = vrot.slane %v530, 5
        %v533 = vsel %vm191, %v528, %v532
        %v535 = vshrl.u32 %v502, 16
        %v537 = vrot.slane %v535, 4
        %v538 = vshll.u32 %v502, 16
        %v540 = vrot.slane %v538, 5
        %v541 = vor.u32 %v537, %v540
        %v542 = vrot.slane %v541, 4
        %v544 = vshll.u32 %v503, 16
        %v546 = vrot.slane %v544, 5
        %v547 = vsel %vm191, %v542, %v546
        %v549 = vshrl.u32 %v504, 16
        %v551 = vrot.slane %v549, 4
        %v552 = vshll.u32 %v504, 16
        %v554 = vrot.slane %v552, 5
        %v555 = vor.u32 %v551, %v554
        %v556 = vrot.slane %v555, 4
        %v558 = vshll.u32 %v505, 16
        %v560 = vrot.slane %v558, 5
        %v561 = vsel %vm191, %v556, %v560
        %s562 = scalar_lea.vmem %s1, 48
        %v563 = vld [vmem:[%s562] sm:$0xf]
        %v564 = vld [vmem:[%s562 + $0x4] sm:$0xf]
        %v565 = vld [vmem:[%s562 + $0x8] sm:$0xf]
        %v566 = vld [vmem:[%s562 + $0xc] sm:$0xf]
        %v567 = vunpack.c.l.b16 %v519
        %v568 = vunpack.c.l.b16 %v533
        %v569 = vunpack.c.l.b16 %v547
        %v570 = vunpack.c.l.b16 %v561
        %v571 = vpack.c.b16 %v568, %v567
        %v572 = vpack.c.b16 %v570, %v569
        %v577 = vunpack.c.l.b16 %v563
        %v578 = vunpack.c.l.b16 %v564
        %v579 = vunpack.c.l.b16 %v565
        %v580 = vunpack.c.l.b16 %v566
        %v581 = vpack.c.b16 %v578, %v577
        %v582 = vpack.c.b16 %v580, %v579
        %v586 = vsel %vm271, %v571, 0
        %v589 = vsel %vm271, %v572, 0
        %591 = vmatprep.subr.bf16.mxu0 0
        %592 = vmatpush1.bf16.msra.mxu0 %v581
        %593 = vmatprep.subr.bf16.mxu0 0
        %594 = vmatpush1.bf16.msra.mxu0 %v582
        %595 = vmatprep.subr.bf16.mxu0 0
        %596 = vmatpush1.bf16.msra.mxu0 0
        %597 = vmatprep.subr.bf16.mxu0 0
        %598 = vmatpush1.bf16.msra.mxu0 0
        %599 = vmatprep.subr.bf16.mxu0 0
        %600 = vmatpush1.bf16.msra.mxu0 0
        %601 = vmatprep.subr.bf16.mxu0 0
        %602 = vmatpush1.bf16.msra.mxu0 0
        %603 = vmatprep.subr.bf16.mxu0 0
        %604 = vmatpush1.bf16.msra.mxu0 0
        %605 = vmatprep.subr.bf16.mxu0 0
        %606 = vmatpush1.bf16.msra.mxu0 0
        %607 = vmatprep.subr.bf16.mxu0 0
        %608 = vmatpush1.bf16.msra.mxu0 0
        %609 = vmatprep.subr.bf16.mxu0 0
        %610 = vmatpush1.bf16.msra.mxu0 0
        %611 = vmatprep.subr.bf16.mxu0 0
        %612 = vmatpush1.bf16.msra.mxu0 0
        %613 = vmatprep.subr.bf16.mxu0 0
        %614 = vmatpush1.bf16.msra.mxu0 0
        %615 = vmatprep.subr.bf16.mxu0 0
        %616 = vmatpush1.bf16.msra.mxu0 0
        %617 = vmatprep.subr.bf16.mxu0 0
        %618 = vmatpush1.bf16.msra.mxu0 0
        %619 = vmatprep.subr.bf16.mxu0 0
        %620 = vmatpush1.bf16.msra.mxu0 0
        %621 = vmatprep.subr.bf16.mxu0 0
        %622 = vmatpush1.bf16.msra.mxu0 0
        %623 = vmatprep.mubr.bf16.mxu0 0
        %624 = vmatmul.mubr.bf16.gmra.mrb[0].mxu0 %v586
        %v625 = vpop.f32.mrb[0].mxu0
        %v626 = vadd.f32 0.0, %v625
        %v627 = vpop.f32.mrb[0].mxu0
        %v628 = vpop.f32.mrb[0].mxu0
        %v629 = vadd.f32 0.0, %v628
        %v630 = vpop.f32.mrb[0].mxu0
        %631 = vmatprep.mubr.bf16.mxu0 0
        %632 = vmatmul.mubr.bf16.gmra.mrb[0].mxu0 %v589
        %v633 = vpop.f32.mrb[0].mxu0
        %v634 = vadd.f32 0.0, %v633
        %v635 = vpop.f32.mrb[0].mxu0
        %v636 = vpop.f32.mrb[0].mxu0
        %v637 = vadd.f32 0.0, %v636
        %v638 = vpop.f32.mrb[0].mxu0
        %639 = vdwg.mxu0
        %v640 = vadd.f32 %v494, %v626
        %v641 = vadd.f32 %v495, %v629
        %v642 = vadd.f32 %v496, %v634
        %v643 = vadd.f32 %v497, %v637
        %s644 = scalar_lea.vmem %s1, 64
        %v645 = vld [vmem:[%s644] sm:$0xf]
        %v646 = vld [vmem:[%s644 + $0x4] sm:$0xf]
        %v647 = vld [vmem:[%s644 + $0x8] sm:$0xf]
        %v648 = vld [vmem:[%s644 + $0xc] sm:$0xf]
        %v649 = vld [vmem:[%s176] sm:$0xe]
        %v650 = vld [vmem:[%s176 + $0x8] sm:$0xe]
        %v651 = vld [vmem:[%s176 + $0x10] sm:$0xe]
        %v652 = vld [vmem:[%s176 + $0x18] sm:$0xe]
        %vm661 = vcmask 1042432
        %vm662 = vcmask 1046532
        %vm663 = vmor %vm661, %vm662
        %v664 = vrot.slane %v649, 5
        %v665 = vrot.slane %v664, 4
        %v666 = vrot.slane %v185, 5
        %v667 = vsel %vm663, %v665, %v666
        %v668 = vrot.slane %v650, 5
        %v669 = vrot.slane %v668, 4
        %v670 = vrot.slane %v186, 5
        %v671 = vsel %vm663, %v669, %v670
        %v672 = vrot.slane %v651, 5
        %v673 = vrot.slane %v672, 4
        %v674 = vrot.slane %v187, 5
        %v675 = vsel %vm663, %v673, %v674
        %v676 = vrot.slane %v652, 5
        %v677 = vrot.slane %v676, 4
        %v678 = vrot.slane %v188, 5
        %v679 = vsel %vm663, %v677, %v678
        %s680 = scalar_lea.vmem %s1, 80
        %v681 = vld [vmem:[%s680] sm:$0xf]
        %v682 = vld [vmem:[%s680 + $0x4] sm:$0xf]
        %v683 = vld [vmem:[%s680 + $0x8] sm:$0xf]
        %v684 = vld [vmem:[%s680 + $0xc] sm:$0xf]
        %v685 = vunpack.c.l.b16 %v667
        %v686 = vunpack.c.l.b16 %v671
        %v687 = vunpack.c.l.b16 %v675
        %v688 = vunpack.c.l.b16 %v679
        %v689 = vpack.c.b16 %v686, %v685
        %v690 = vpack.c.b16 %v688, %v687
        %v695 = vunpack.c.l.b16 %v681
        %v696 = vunpack.c.l.b16 %v682
        %v697 = vunpack.c.l.b16 %v683
        %v698 = vunpack.c.l.b16 %v684
        %v699 = vpack.c.b16 %v696, %v695
        %v700 = vpack.c.b16 %v698, %v697
        %v704 = vsel %vm271, %v689, 0
        %v707 = vsel %vm271, %v690, 0
        %709 = vmatprep.subr.bf16.mxu0 0
        %710 = vmatpush1.bf16.msra.mxu0 %v699
        %711 = vmatprep.subr.bf16.mxu0 0
        %712 = vmatpush1.bf16.msra.mxu0 %v700
        %713 = vmatprep.subr.bf16.mxu0 0
        %714 = vmatpush1.bf16.msra.mxu0 0
        %715 = vmatprep.subr.bf16.mxu0 0
        %716 = vmatpush1.bf16.msra.mxu0 0
        %717 = vmatprep.subr.bf16.mxu0 0
        %718 = vmatpush1.bf16.msra.mxu0 0
        %719 = vmatprep.subr.bf16.mxu0 0
        %720 = vmatpush1.bf16.msra.mxu0 0
        %721 = vmatprep.subr.bf16.mxu0 0
        %722 = vmatpush1.bf16.msra.mxu0 0
        %723 = vmatprep.subr.bf16.mxu0 0
        %724 = vmatpush1.bf16.msra.mxu0 0
        %725 = vmatprep.subr.bf16.mxu0 0
        %726 = vmatpush1.bf16.msra.mxu0 0
        %727 = vmatprep.subr.bf16.mxu0 0
        %728 = vmatpush1.bf16.msra.mxu0 0
        %729 = vmatprep.subr.bf16.mxu0 0
        %730 = vmatpush1.bf16.msra.mxu0 0
        %731 = vmatprep.subr.bf16.mxu0 0
        %732 = vmatpush1.bf16.msra.mxu0 0
        %733 = vmatprep.subr.bf16.mxu0 0
        %734 = vmatpush1.bf16.msra.mxu0 0
        %735 = vmatprep.subr.bf16.mxu0 0
        %736 = vmatpush1.bf16.msra.mxu0 0
        %737 = vmatprep.subr.bf16.mxu0 0
        %738 = vmatpush1.bf16.msra.mxu0 0
        %739 = vmatprep.subr.bf16.mxu0 0
        %740 = vmatpush1.bf16.msra.mxu0 0
        %741 = vmatprep.mubr.bf16.mxu0 0
        %742 = vmatmul.mubr.bf16.gmra.mrb[0].mxu0 %v704
        %v743 = vpop.f32.mrb[0].mxu0
        %v744 = vadd.f32 0.0, %v743
        %v745 = vpop.f32.mrb[0].mxu0
        %v746 = vpop.f32.mrb[0].mxu0
        %v747 = vadd.f32 0.0, %v746
        %v748 = vpop.f32.mrb[0].mxu0
        %749 = vmatprep.mubr.bf16.mxu0 0
        %750 = vmatmul.mubr.bf16.gmra.mrb[0].mxu0 %v707
        %v751 = vpop.f32.mrb[0].mxu0
        %v752 = vadd.f32 0.0, %v751
        %v753 = vpop.f32.mrb[0].mxu0
        %v754 = vpop.f32.mrb[0].mxu0
        %v755 = vadd.f32 0.0, %v754
        %v756 = vpop.f32.mrb[0].mxu0
        %757 = vdwg.mxu0
        %v762 = vunpack.c.l.b16 %v645
        %v763 = vunpack.c.l.b16 %v646
        %v764 = vunpack.c.l.b16 %v647
        %v765 = vunpack.c.l.b16 %v648
        %v766 = vpack.c.b16 %v763, %v762
        %v767 = vpack.c.b16 %v765, %v764
        %770 = vmatprep.subr.bf16.mxu0 0
        %771 = vmatpush1.bf16.msra.mxu0 %v766
        %772 = vmatprep.subr.bf16.mxu0 0
        %773 = vmatpush1.bf16.msra.mxu0 %v767
        %774 = vmatprep.subr.bf16.mxu0 0
        %775 = vmatpush1.bf16.msra.mxu0 0
        %776 = vmatprep.subr.bf16.mxu0 0
        %777 = vmatpush1.bf16.msra.mxu0 0
        %778 = vmatprep.subr.bf16.mxu0 0
        %779 = vmatpush1.bf16.msra.mxu0 0
        %780 = vmatprep.subr.bf16.mxu0 0
        %781 = vmatpush1.bf16.msra.mxu0 0
        %782 = vmatprep.subr.bf16.mxu0 0
        %783 = vmatpush1.bf16.msra.mxu0 0
        %784 = vmatprep.subr.bf16.mxu0 0
        %785 = vmatpush1.bf16.msra.mxu0 0
        %786 = vmatprep.subr.bf16.mxu0 0
        %787 = vmatpush1.bf16.msra.mxu0 0
        %788 = vmatprep.subr.bf16.mxu0 0
        %789 = vmatpush1.bf16.msra.mxu0 0
        %790 = vmatprep.subr.bf16.mxu0 0
        %791 = vmatpush1.bf16.msra.mxu0 0
        %792 = vmatprep.subr.bf16.mxu0 0
        %793 = vmatpush1.bf16.msra.mxu0 0
        %794 = vmatprep.subr.bf16.mxu0 0
        %795 = vmatpush1.bf16.msra.mxu0 0
        %796 = vmatprep.subr.bf16.mxu0 0
        %797 = vmatpush1.bf16.msra.mxu0 0
        %798 = vmatprep.subr.bf16.mxu0 0
        %799 = vmatpush1.bf16.msra.mxu0 0
        %800 = vmatprep.subr.bf16.mxu0 0
        %801 = vmatpush1.bf16.msra.mxu0 0
        %802 = vmatprep.mubr.bf16.mxu0 0
        %803 = vmatmul.mubr.bf16.gmra.mrb[0].mxu0 %v273
        %v804 = vpop.f32.mrb[0].mxu0
        %v805 = vadd.f32 %v744, %v804
        %v806 = vpop.f32.mrb[0].mxu0
        %v807 = vpop.f32.mrb[0].mxu0
        %v808 = vadd.f32 %v747, %v807
        %v809 = vpop.f32.mrb[0].mxu0
        %810 = vmatprep.mubr.bf16.mxu0 0
        %811 = vmatmul.mubr.bf16.gmra.mrb[0].mxu0 %v276
        %v812 = vpop.f32.mrb[0].mxu0
        %v813 = vadd.f32 %v752, %v812
        %v814 = vpop.f32.mrb[0].mxu0
        %v815 = vpop.f32.mrb[0].mxu0
        %v816 = vadd.f32 %v755, %v815
        %v817 = vpop.f32.mrb[0].mxu0
        %818 = vdwg.mxu0
        %s819 = scalar_lea.vmem %s1, 96
        %v820 = vld [vmem:[%s819] sm:$0xf]
        %v821 = vld [vmem:[%s819 + $0x4] sm:$0xf]
        %v822 = vld [vmem:[%s819 + $0x8] sm:$0xf]
        %v823 = vld [vmem:[%s819 + $0xc] sm:$0xf]
        %v828 = vunpack.c.l.b16 %v820
        %v829 = vunpack.c.l.b16 %v821
        %v830 = vunpack.c.l.b16 %v822
        %v831 = vunpack.c.l.b16 %v823
        %v832 = vpack.c.b16 %v829, %v828
        %v833 = vpack.c.b16 %v831, %v830
        %836 = vmatprep.subr.bf16.mxu0 0
        %837 = vmatpush1.bf16.msra.mxu0 %v832
        %838 = vmatprep.subr.bf16.mxu0 0
        %839 = vmatpush1.bf16.msra.mxu0 %v833
        %840 = vmatprep.subr.bf16.mxu0 0
        %841 = vmatpush1.bf16.msra.mxu0 0
        %842 = vmatprep.subr.bf16.mxu0 0
        %843 = vmatpush1.bf16.msra.mxu0 0
        %844 = vmatprep.subr.bf16.mxu0 0
        %845 = vmatpush1.bf16.msra.mxu0 0
        %846 = vmatprep.subr.bf16.mxu0 0
        %847 = vmatpush1.bf16.msra.mxu0 0
        %848 = vmatprep.subr.bf16.mxu0 0
        %849 = vmatpush1.bf16.msra.mxu0 0
        %850 = vmatprep.subr.bf16.mxu0 0
        %851 = vmatpush1.bf16.msra.mxu0 0
        %852 = vmatprep.subr.bf16.mxu0 0
        %853 = vmatpush1.bf16.msra.mxu0 0
        %854 = vmatprep.subr.bf16.mxu0 0
        %855 = vmatpush1.bf16.msra.mxu0 0
        %856 = vmatprep.subr.bf16.mxu0 0
        %857 = vmatpush1.bf16.msra.mxu0 0
        %858 = vmatprep.subr.bf16.mxu0 0
        %859 = vmatpush1.bf16.msra.mxu0 0
        %860 = vmatprep.subr.bf16.mxu0 0
        %861 = vmatpush1.bf16.msra.mxu0 0
        %862 = vmatprep.subr.bf16.mxu0 0
        %863 = vmatpush1.bf16.msra.mxu0 0
        %864 = vmatprep.subr.bf16.mxu0 0
        %865 = vmatpush1.bf16.msra.mxu0 0
        %866 = vmatprep.subr.bf16.mxu0 0
        %867 = vmatpush1.bf16.msra.mxu0 0
        %868 = vmatprep.mubr.bf16.mxu0 0
        %869 = vmatmul.mubr.bf16.gmra.mrb[0].mxu0 %v586
        %v870 = vpop.f32.mrb[0].mxu0
        %v871 = vadd.f32 0.0, %v870
        %v872 = vpop.f32.mrb[0].mxu0
        %v873 = vpop.f32.mrb[0].mxu0
        %v874 = vadd.f32 0.0, %v873
        %v875 = vpop.f32.mrb[0].mxu0
        %876 = vmatprep.mubr.bf16.mxu0 0
        %877 = vmatmul.mubr.bf16.gmra.mrb[0].mxu0 %v589
        %v878 = vpop.f32.mrb[0].mxu0
        %v879 = vadd.f32 0.0, %v878
        %v880 = vpop.f32.mrb[0].mxu0
        %v881 = vpop.f32.mrb[0].mxu0
        %v882 = vadd.f32 0.0, %v881
        %v883 = vpop.f32.mrb[0].mxu0
        %884 = vdwg.mxu0
        %v885 = vadd.f32 %v805, %v871
        %v886 = vadd.f32 %v808, %v874
        %v887 = vadd.f32 %v813, %v879
        %v888 = vadd.f32 %v816, %v882
        %v889 = vld [vmem:[%s407] sm:$0xe]
        %v890 = vld [vmem:[%s407 + $0x8] sm:$0xe]
        %v891 = vld [vmem:[%s407 + $0x10] sm:$0xe]
        %v892 = vld [vmem:[%s407 + $0x18] sm:$0xe]
        %v901 = vrot.slane %v889, 5
        %v902 = vrot.slane %v901, 4
        %v903 = vrot.slane %v499, 5
        %v904 = vsel %vm663, %v902, %v903
        %v905 = vrot.slane %v890, 5
        %v906 = vrot.slane %v905, 4
        %v907 = vrot.slane %v501, 5
        %v908 = vsel %vm663, %v906, %v907
        %v909 = vrot.slane %v891, 5
        %v910 = vrot.slane %v909, 4
        %v911 = vrot.slane %v503, 5
        %v912 = vsel %vm663, %v910, %v911
        %v913 = vrot.slane %v892, 5
        %v914 = vrot.slane %v913, 4
        %v915 = vrot.slane %v505, 5
        %v916 = vsel %vm663, %v914, %v915
        %s917 = scalar_lea.vmem %s1, 112
        %v918 = vld [vmem:[%s917] sm:$0xf]
        %v919 = vld [vmem:[%s917 + $0x4] sm:$0xf]
        %v920 = vld [vmem:[%s917 + $0x8] sm:$0xf]
        %v921 = vld [vmem:[%s917 + $0xc] sm:$0xf]
        %v922 = vunpack.c.l.b16 %v904
        %v923 = vunpack.c.l.b16 %v908
        %v924 = vunpack.c.l.b16 %v912
        %v925 = vunpack.c.l.b16 %v916
        %v926 = vpack.c.b16 %v923, %v922
        %v927 = vpack.c.b16 %v925, %v924
        %v932 = vunpack.c.l.b16 %v918
        %v933 = vunpack.c.l.b16 %v919
        %v934 = vunpack.c.l.b16 %v920
        %v935 = vunpack.c.l.b16 %v921
        %v936 = vpack.c.b16 %v933, %v932
        %v937 = vpack.c.b16 %v935, %v934
        %v941 = vsel %vm271, %v926, 0
        %v944 = vsel %vm271, %v927, 0
        %946 = vmatprep.subr.bf16.mxu0 0
        %947 = vmatpush1.bf16.msra.mxu0 %v936
        %948 = vmatprep.subr.bf16.mxu0 0
        %949 = vmatpush1.bf16.msra.mxu0 %v937
        %950 = vmatprep.subr.bf16.mxu0 0
        %951 = vmatpush1.bf16.msra.mxu0 0
        %952 = vmatprep.subr.bf16.mxu0 0
        %953 = vmatpush1.bf16.msra.mxu0 0
        %954 = vmatprep.subr.bf16.mxu0 0
        %955 = vmatpush1.bf16.msra.mxu0 0
        %956 = vmatprep.subr.bf16.mxu0 0
        %957 = vmatpush1.bf16.msra.mxu0 0
        %958 = vmatprep.subr.bf16.mxu0 0
        %959 = vmatpush1.bf16.msra.mxu0 0
        %960 = vmatprep.subr.bf16.mxu0 0
        %961 = vmatpush1.bf16.msra.mxu0 0
        %962 = vmatprep.subr.bf16.mxu0 0
        %963 = vmatpush1.bf16.msra.mxu0 0
        %964 = vmatprep.subr.bf16.mxu0 0
        %965 = vmatpush1.bf16.msra.mxu0 0
        %966 = vmatprep.subr.bf16.mxu0 0
        %967 = vmatpush1.bf16.msra.mxu0 0
        %968 = vmatprep.subr.bf16.mxu0 0
        %969 = vmatpush1.bf16.msra.mxu0 0
        %970 = vmatprep.subr.bf16.mxu0 0
        %971 = vmatpush1.bf16.msra.mxu0 0
        %972 = vmatprep.subr.bf16.mxu0 0
        %973 = vmatpush1.bf16.msra.mxu0 0
        %974 = vmatprep.subr.bf16.mxu0 0
        %975 = vmatpush1.bf16.msra.mxu0 0
        %976 = vmatprep.subr.bf16.mxu0 0
        %977 = vmatpush1.bf16.msra.mxu0 0
        %978 = vmatprep.mubr.bf16.mxu0 0
        %979 = vmatmul.mubr.bf16.gmra.mrb[0].mxu0 %v941
        %v980 = vpop.f32.mrb[0].mxu0
        %v981 = vadd.f32 0.0, %v980
        %v982 = vpop.f32.mrb[0].mxu0
        %v983 = vpop.f32.mrb[0].mxu0
        %v984 = vadd.f32 0.0, %v983
        %v985 = vpop.f32.mrb[0].mxu0
        %986 = vmatprep.mubr.bf16.mxu0 0
        %987 = vmatmul.mubr.bf16.gmra.mrb[0].mxu0 %v944
        %v988 = vpop.f32.mrb[0].mxu0
        %v989 = vadd.f32 0.0, %v988
        %v990 = vpop.f32.mrb[0].mxu0
        %v991 = vpop.f32.mrb[0].mxu0
        %v992 = vadd.f32 0.0, %v991
        %v993 = vpop.f32.mrb[0].mxu0
        %994 = vdwg.mxu0
        %v995 = vadd.f32 %v885, %v981
        %v996 = vadd.f32 %v886, %v984
        %v997 = vadd.f32 %v887, %v989
        %v998 = vadd.f32 %v888, %v992
        %s999 = scalar_lea.vmem %s1, 128
        %v1000 = vld [vmem:[%s999] sm:$0xf]
        %v1001 = vld [vmem:[%s999 + $0x4] sm:$0xf]
        %v1002 = vld [vmem:[%s999 + $0x8] sm:$0xf]
        %v1003 = vld [vmem:[%s999 + $0xc] sm:$0xf]
        %s1004 = scalar_lea.vmem %s1, 144
        %v1005 = vld [vmem:[%s1004] sm:$0xf]
        %v1006 = vld [vmem:[%s1004 + $0x4] sm:$0xf]
        %v1007 = vld [vmem:[%s1004 + $0x8] sm:$0xf]
        %v1008 = vld [vmem:[%s1004 + $0xc] sm:$0xf]
        %v1013 = vunpack.c.l.b16 %v1005
        %v1014 = vunpack.c.l.b16 %v1006
        %v1015 = vunpack.c.l.b16 %v1007
        %v1016 = vunpack.c.l.b16 %v1008
        %v1017 = vpack.c.b16 %v1014, %v1013
        %v1018 = vpack.c.b16 %v1016, %v1015
        %1021 = vmatprep.subr.bf16.mxu0 0
        %1022 = vmatpush1.bf16.msra.mxu0 %v1017
        %1023 = vmatprep.subr.bf16.mxu0 0
        %1024 = vmatpush1.bf16.msra.mxu0 %v1018
        %1025 = vmatprep.subr.bf16.mxu0 0
        %1026 = vmatpush1.bf16.msra.mxu0 0
        %1027 = vmatprep.subr.bf16.mxu0 0
        %1028 = vmatpush1.bf16.msra.mxu0 0
        %1029 = vmatprep.subr.bf16.mxu0 0
        %1030 = vmatpush1.bf16.msra.mxu0 0
        %1031 = vmatprep.subr.bf16.mxu0 0
        %1032 = vmatpush1.bf16.msra.mxu0 0
        %1033 = vmatprep.subr.bf16.mxu0 0
        %1034 = vmatpush1.bf16.msra.mxu0 0
        %1035 = vmatprep.subr.bf16.mxu0 0
        %1036 = vmatpush1.bf16.msra.mxu0 0
        %1037 = vmatprep.subr.bf16.mxu0 0
        %1038 = vmatpush1.bf16.msra.mxu0 0
        %1039 = vmatprep.subr.bf16.mxu0 0
        %1040 = vmatpush1.bf16.msra.mxu0 0
        %1041 = vmatprep.subr.bf16.mxu0 0
        %1042 = vmatpush1.bf16.msra.mxu0 0
        %1043 = vmatprep.subr.bf16.mxu0 0
        %1044 = vmatpush1.bf16.msra.mxu0 0
        %1045 = vmatprep.subr.bf16.mxu0 0
        %1046 = vmatpush1.bf16.msra.mxu0 0
        %1047 = vmatprep.subr.bf16.mxu0 0
        %1048 = vmatpush1.bf16.msra.mxu0 0
        %1049 = vmatprep.subr.bf16.mxu0 0
        %1050 = vmatpush1.bf16.msra.mxu0 0
        %1051 = vmatprep.subr.bf16.mxu0 0
        %1052 = vmatpush1.bf16.msra.mxu0 0
        %1053 = vmatprep.mubr.bf16.mxu0 0
        %1054 = vmatmul.mubr.bf16.gmra.mrb[0].mxu0 %v586
        %v1055 = vpop.f32.mrb[0].mxu0
        %v1056 = vadd.f32 0.0, %v1055
        %v1057 = vpop.f32.mrb[0].mxu0
        %v1058 = vpop.f32.mrb[0].mxu0
        %v1059 = vadd.f32 0.0, %v1058
        %v1060 = vpop.f32.mrb[0].mxu0
        %1061 = vmatprep.mubr.bf16.mxu0 0
        %1062 = vmatmul.mubr.bf16.gmra.mrb[0].mxu0 %v589
        %v1063 = vpop.f32.mrb[0].mxu0
        %v1064 = vadd.f32 0.0, %v1063
        %v1065 = vpop.f32.mrb[0].mxu0
        %v1066 = vpop.f32.mrb[0].mxu0
        %v1067 = vadd.f32 0.0, %v1066
        %v1068 = vpop.f32.mrb[0].mxu0
        %1069 = vdwg.mxu0
        %v1074 = vunpack.c.l.b16 %v1000
        %v1075 = vunpack.c.l.b16 %v1001
        %v1076 = vunpack.c.l.b16 %v1002
        %v1077 = vunpack.c.l.b16 %v1003
        %v1078 = vpack.c.b16 %v1075, %v1074
        %v1079 = vpack.c.b16 %v1077, %v1076
        %1082 = vmatprep.subr.bf16.mxu0 0
        %1083 = vmatpush1.bf16.msra.mxu0 %v1078
        %1084 = vmatprep.subr.bf16.mxu0 0
        %1085 = vmatpush1.bf16.msra.mxu0 %v1079
        %1086 = vmatprep.subr.bf16.mxu0 0
        %1087 = vmatpush1.bf16.msra.mxu0 0
        %1088 = vmatprep.subr.bf16.mxu0 0
        %1089 = vmatpush1.bf16.msra.mxu0 0
        %1090 = vmatprep.subr.bf16.mxu0 0
        %1091 = vmatpush1.bf16.msra.mxu0 0
        %1092 = vmatprep.subr.bf16.mxu0 0
        %1093 = vmatpush1.bf16.msra.mxu0 0
        %1094 = vmatprep.subr.bf16.mxu0 0
        %1095 = vmatpush1.bf16.msra.mxu0 0
        %1096 = vmatprep.subr.bf16.mxu0 0
        %1097 = vmatpush1.bf16.msra.mxu0 0
        %1098 = vmatprep.subr.bf16.mxu0 0
        %1099 = vmatpush1.bf16.msra.mxu0 0
        %1100 = vmatprep.subr.bf16.mxu0 0
        %1101 = vmatpush1.bf16.msra.mxu0 0
        %1102 = vmatprep.subr.bf16.mxu0 0
        %1103 = vmatpush1.bf16.msra.mxu0 0
        %1104 = vmatprep.subr.bf16.mxu0 0
        %1105 = vmatpush1.bf16.msra.mxu0 0
        %1106 = vmatprep.subr.bf16.mxu0 0
        %1107 = vmatpush1.bf16.msra.mxu0 0
        %1108 = vmatprep.subr.bf16.mxu0 0
        %1109 = vmatpush1.bf16.msra.mxu0 0
        %1110 = vmatprep.subr.bf16.mxu0 0
        %1111 = vmatpush1.bf16.msra.mxu0 0
        %1112 = vmatprep.subr.bf16.mxu0 0
        %1113 = vmatpush1.bf16.msra.mxu0 0
        %1114 = vmatprep.mubr.bf16.mxu0 0
        %1115 = vmatmul.mubr.bf16.gmra.mrb[0].mxu0 %v440
        %v1116 = vpop.f32.mrb[0].mxu0
        %v1117 = vadd.f32 %v1056, %v1116
        %v1118 = vpop.f32.mrb[0].mxu0
        %v1119 = vpop.f32.mrb[0].mxu0
        %v1120 = vadd.f32 %v1059, %v1119
        %v1121 = vpop.f32.mrb[0].mxu0
        %1122 = vmatprep.mubr.bf16.mxu0 0
        %1123 = vmatmul.mubr.bf16.gmra.mrb[0].mxu0 %v443
        %v1124 = vpop.f32.mrb[0].mxu0
        %v1125 = vadd.f32 %v1064, %v1124
        %v1126 = vpop.f32.mrb[0].mxu0
        %v1127 = vpop.f32.mrb[0].mxu0
        %v1128 = vadd.f32 %v1067, %v1127
        %v1129 = vpop.f32.mrb[0].mxu0
        %1130 = vdwg.mxu0
        %s1131 = sadd.s32 %s164, 2
        %s1132 = smul.u32 %s1131, 2
        %s1133 = smul.addr %s1132, 4
        %s1134 = scalar_lea.vmem %s160, %s1133
        %v1135 = vld [vmem:[%s1134] sm:$0xf]
        %v1136 = vld [vmem:[%s1134 + $0x8] sm:$0xf]
        %v1137 = vld [vmem:[%s1134 + $0x10] sm:$0xf]
        %v1138 = vld [vmem:[%s1134 + $0x18] sm:$0xf]
        %s1139 = scalar_lea.vmem %s1, 160
        %v1140 = vld [vmem:[%s1139] sm:$0xf]
        %v1141 = vld [vmem:[%s1139 + $0x4] sm:$0xf]
        %v1142 = vld [vmem:[%s1139 + $0x8] sm:$0xf]
        %v1143 = vld [vmem:[%s1139 + $0xc] sm:$0xf]
        %v1148 = vunpack.c.l.b16 %v1135
        %v1149 = vunpack.c.l.b16 %v1136
        %v1150 = vunpack.c.l.b16 %v1137
        %v1151 = vunpack.c.l.b16 %v1138
        %v1152 = vpack.c.b16 %v1149, %v1148
        %v1153 = vpack.c.b16 %v1151, %v1150
        %v1158 = vunpack.c.l.b16 %v1140
        %v1159 = vunpack.c.l.b16 %v1141
        %v1160 = vunpack.c.l.b16 %v1142
        %v1161 = vunpack.c.l.b16 %v1143
        %v1162 = vpack.c.b16 %v1159, %v1158
        %v1163 = vpack.c.b16 %v1161, %v1160
        %v1167 = vsel %vm271, %v1152, 0
        %v1170 = vsel %vm271, %v1153, 0
        %1172 = vmatprep.subr.bf16.mxu0 0
        %1173 = vmatpush1.bf16.msra.mxu0 %v1162
        %1174 = vmatprep.subr.bf16.mxu0 0
        %1175 = vmatpush1.bf16.msra.mxu0 %v1163
        %1176 = vmatprep.subr.bf16.mxu0 0
        %1177 = vmatpush1.bf16.msra.mxu0 0
        %1178 = vmatprep.subr.bf16.mxu0 0
        %1179 = vmatpush1.bf16.msra.mxu0 0
        %1180 = vmatprep.subr.bf16.mxu0 0
        %1181 = vmatpush1.bf16.msra.mxu0 0
        %1182 = vmatprep.subr.bf16.mxu0 0
        %1183 = vmatpush1.bf16.msra.mxu0 0
        %1184 = vmatprep.subr.bf16.mxu0 0
        %1185 = vmatpush1.bf16.msra.mxu0 0
        %1186 = vmatprep.subr.bf16.mxu0 0
        %1187 = vmatpush1.bf16.msra.mxu0 0
        %1188 = vmatprep.subr.bf16.mxu0 0
        %1189 = vmatpush1.bf16.msra.mxu0 0
        %1190 = vmatprep.subr.bf16.mxu0 0
        %1191 = vmatpush1.bf16.msra.mxu0 0
        %1192 = vmatprep.subr.bf16.mxu0 0
        %1193 = vmatpush1.bf16.msra.mxu0 0
        %1194 = vmatprep.subr.bf16.mxu0 0
        %1195 = vmatpush1.bf16.msra.mxu0 0
        %1196 = vmatprep.subr.bf16.mxu0 0
        %1197 = vmatpush1.bf16.msra.mxu0 0
        %1198 = vmatprep.subr.bf16.mxu0 0
        %1199 = vmatpush1.bf16.msra.mxu0 0
        %1200 = vmatprep.subr.bf16.mxu0 0
        %1201 = vmatpush1.bf16.msra.mxu0 0
        %1202 = vmatprep.subr.bf16.mxu0 0
        %1203 = vmatpush1.bf16.msra.mxu0 0
        %1204 = vmatprep.mubr.bf16.mxu0 0
        %1205 = vmatmul.mubr.bf16.gmra.mrb[0].mxu0 %v1167
        %v1206 = vpop.f32.mrb[0].mxu0
        %v1207 = vadd.f32 0.0, %v1206
        %v1208 = vpop.f32.mrb[0].mxu0
        %v1209 = vpop.f32.mrb[0].mxu0
        %v1210 = vadd.f32 0.0, %v1209
        %v1211 = vpop.f32.mrb[0].mxu0
        %1212 = vmatprep.mubr.bf16.mxu0 0
        %1213 = vmatmul.mubr.bf16.gmra.mrb[0].mxu0 %v1170
        %v1214 = vpop.f32.mrb[0].mxu0
        %v1215 = vadd.f32 0.0, %v1214
        %v1216 = vpop.f32.mrb[0].mxu0
        %v1217 = vpop.f32.mrb[0].mxu0
        %v1218 = vadd.f32 0.0, %v1217
        %v1219 = vpop.f32.mrb[0].mxu0
        %1220 = vdwg.mxu0
        %v1221 = vadd.f32 %v1117, %v1207
        %v1222 = vadd.f32 %v1120, %v1210
        %v1223 = vadd.f32 %v1125, %v1215
        %v1224 = vadd.f32 %v1128, %v1218
        %v1225 = vld [vmem:[%s1134] sm:$0xf]
        %v1226 = vld [vmem:[%s1134 + $0x4] sm:$0x1]
        %v1227 = vld [vmem:[%s1134 + $0x8] sm:$0xf]
        %v1228 = vld [vmem:[%s1134 + $0xc] sm:$0x1]
        %v1229 = vld [vmem:[%s1134 + $0x10] sm:$0xf]
        %v1230 = vld [vmem:[%s1134 + $0x14] sm:$0x1]
        %v1231 = vld [vmem:[%s1134 + $0x18] sm:$0xf]
        %v1232 = vld [vmem:[%s1134 + $0x1c] sm:$0x1]
        %v1234 = vshrl.u32 %v1225, 16
        %v1236 = vrot.slane %v1234, 4
        %v1237 = vshll.u32 %v1225, 16
        %v1239 = vrot.slane %v1237, 5
        %v1240 = vor.u32 %v1236, %v1239
        %v1241 = vrot.slane %v1240, 4
        %v1243 = vshll.u32 %v1226, 16
        %v1245 = vrot.slane %v1243, 5
        %v1246 = vsel %vm191, %v1241, %v1245
        %v1248 = vshrl.u32 %v1227, 16
        %v1250 = vrot.slane %v1248, 4
        %v1251 = vshll.u32 %v1227, 16
        %v1253 = vrot.slane %v1251, 5
        %v1254 = vor.u32 %v1250, %v1253
        %v1255 = vrot.slane %v1254, 4
        %v1257 = vshll.u32 %v1228, 16
        %v1259 = vrot.slane %v1257, 5
        %v1260 = vsel %vm191, %v1255, %v1259
        %v1262 = vshrl.u32 %v1229, 16
        %v1264 = vrot.slane %v1262, 4
        %v1265 = vshll.u32 %v1229, 16
        %v1267 = vrot.slane %v1265, 5
        %v1268 = vor.u32 %v1264, %v1267
        %v1269 = vrot.slane %v1268, 4
        %v1271 = vshll.u32 %v1230, 16
        %v1273 = vrot.slane %v1271, 5
        %v1274 = vsel %vm191, %v1269, %v1273
        %v1276 = vshrl.u32 %v1231, 16
        %v1278 = vrot.slane %v1276, 4
        %v1279 = vshll.u32 %v1231, 16
        %v1281 = vrot.slane %v1279, 5
        %v1282 = vor.u32 %v1278, %v1281
        %v1283 = vrot.slane %v1282, 4
        %v1285 = vshll.u32 %v1232, 16
        %v1287 = vrot.slane %v1285, 5
        %v1288 = vsel %vm191, %v1283, %v1287
        %s1289 = scalar_lea.vmem %s1, 176
        %v1290 = vld [vmem:[%s1289] sm:$0xf]
        %v1291 = vld [vmem:[%s1289 + $0x4] sm:$0xf]
        %v1292 = vld [vmem:[%s1289 + $0x8] sm:$0xf]
        %v1293 = vld [vmem:[%s1289 + $0xc] sm:$0xf]
        %v1294 = vunpack.c.l.b16 %v1246
        %v1295 = vunpack.c.l.b16 %v1260
        %v1296 = vunpack.c.l.b16 %v1274
        %v1297 = vunpack.c.l.b16 %v1288
        %v1298 = vpack.c.b16 %v1295, %v1294
        %v1299 = vpack.c.b16 %v1297, %v1296
        %v1304 = vunpack.c.l.b16 %v1290
        %v1305 = vunpack.c.l.b16 %v1291
        %v1306 = vunpack.c.l.b16 %v1292
        %v1307 = vunpack.c.l.b16 %v1293
        %v1308 = vpack.c.b16 %v1305, %v1304
        %v1309 = vpack.c.b16 %v1307, %v1306
        %v1313 = vsel %vm271, %v1298, 0
        %v1316 = vsel %vm271, %v1299, 0
        %1318 = vmatprep.subr.bf16.mxu0 0
        %1319 = vmatpush1.bf16.msra.mxu0 %v1308
        %1320 = vmatprep.subr.bf16.mxu0 0
        %1321 = vmatpush1.bf16.msra.mxu0 %v1309
        %1322 = vmatprep.subr.bf16.mxu0 0
        %1323 = vmatpush1.bf16.msra.mxu0 0
        %1324 = vmatprep.subr.bf16.mxu0 0
        %1325 = vmatpush1.bf16.msra.mxu0 0
        %1326 = vmatprep.subr.bf16.mxu0 0
        %1327 = vmatpush1.bf16.msra.mxu0 0
        %1328 = vmatprep.subr.bf16.mxu0 0
        %1329 = vmatpush1.bf16.msra.mxu0 0
        %1330 = vmatprep.subr.bf16.mxu0 0
        %1331 = vmatpush1.bf16.msra.mxu0 0
        %1332 = vmatprep.subr.bf16.mxu0 0
        %1333 = vmatpush1.bf16.msra.mxu0 0
        %1334 = vmatprep.subr.bf16.mxu0 0
        %1335 = vmatpush1.bf16.msra.mxu0 0
        %1336 = vmatprep.subr.bf16.mxu0 0
        %1337 = vmatpush1.bf16.msra.mxu0 0
        %1338 = vmatprep.subr.bf16.mxu0 0
        %1339 = vmatpush1.bf16.msra.mxu0 0
        %1340 = vmatprep.subr.bf16.mxu0 0
        %1341 = vmatpush1.bf16.msra.mxu0 0
        %1342 = vmatprep.subr.bf16.mxu0 0
        %1343 = vmatpush1.bf16.msra.mxu0 0
        %1344 = vmatprep.subr.bf16.mxu0 0
        %1345 = vmatpush1.bf16.msra.mxu0 0
        %1346 = vmatprep.subr.bf16.mxu0 0
        %1347 = vmatpush1.bf16.msra.mxu0 0
        %1348 = vmatprep.subr.bf16.mxu0 0
        %1349 = vmatpush1.bf16.msra.mxu0 0
        %1350 = vmatprep.mubr.bf16.mxu0 0
        %1351 = vmatmul.mubr.bf16.gmra.mrb[0].mxu0 %v1313
        %v1352 = vpop.f32.mrb[0].mxu0
        %v1353 = vadd.f32 0.0, %v1352
        %v1354 = vpop.f32.mrb[0].mxu0
        %v1355 = vpop.f32.mrb[0].mxu0
        %v1356 = vadd.f32 0.0, %v1355
        %v1357 = vpop.f32.mrb[0].mxu0
        %1358 = vmatprep.mubr.bf16.mxu0 0
        %1359 = vmatmul.mubr.bf16.gmra.mrb[0].mxu0 %v1316
        %v1360 = vpop.f32.mrb[0].mxu0
        %v1361 = vadd.f32 0.0, %v1360
        %v1362 = vpop.f32.mrb[0].mxu0
        %v1363 = vpop.f32.mrb[0].mxu0
        %v1364 = vadd.f32 0.0, %v1363
        %v1365 = vpop.f32.mrb[0].mxu0
        %1366 = vdwg.mxu0
        %v1367 = vadd.f32 %v1221, %v1353
        %v1368 = vadd.f32 %v1222, %v1356
        %v1369 = vadd.f32 %v1223, %v1361
        %v1370 = vadd.f32 %v1224, %v1364
        %s1371 = scalar_lea.vmem %s1, 192
        %v1372 = vld [vmem:[%s1371] sm:$0xf]
        %v1373 = vld [vmem:[%s1371 + $0x4] sm:$0xf]
        %v1374 = vld [vmem:[%s1371 + $0x8] sm:$0xf]
        %v1375 = vld [vmem:[%s1371 + $0xc] sm:$0xf]
        %s1376 = scalar_lea.vmem %s1, 208
        %v1377 = vld [vmem:[%s1376] sm:$0xf]
        %v1378 = vld [vmem:[%s1376 + $0x4] sm:$0xf]
        %v1379 = vld [vmem:[%s1376 + $0x8] sm:$0xf]
        %v1380 = vld [vmem:[%s1376 + $0xc] sm:$0xf]
        %v1385 = vunpack.c.l.b16 %v1377
        %v1386 = vunpack.c.l.b16 %v1378
        %v1387 = vunpack.c.l.b16 %v1379
        %v1388 = vunpack.c.l.b16 %v1380
        %v1389 = vpack.c.b16 %v1386, %v1385
        %v1390 = vpack.c.b16 %v1388, %v1387
        %1393 = vmatprep.subr.bf16.mxu0 0
        %1394 = vmatpush1.bf16.msra.mxu0 %v1389
        %1395 = vmatprep.subr.bf16.mxu0 0
        %1396 = vmatpush1.bf16.msra.mxu0 %v1390
        %1397 = vmatprep.subr.bf16.mxu0 0
        %1398 = vmatpush1.bf16.msra.mxu0 0
        %1399 = vmatprep.subr.bf16.mxu0 0
        %1400 = vmatpush1.bf16.msra.mxu0 0
        %1401 = vmatprep.subr.bf16.mxu0 0
        %1402 = vmatpush1.bf16.msra.mxu0 0
        %1403 = vmatprep.subr.bf16.mxu0 0
        %1404 = vmatpush1.bf16.msra.mxu0 0
        %1405 = vmatprep.subr.bf16.mxu0 0
        %1406 = vmatpush1.bf16.msra.mxu0 0
        %1407 = vmatprep.subr.bf16.mxu0 0
        %1408 = vmatpush1.bf16.msra.mxu0 0
        %1409 = vmatprep.subr.bf16.mxu0 0
        %1410 = vmatpush1.bf16.msra.mxu0 0
        %1411 = vmatprep.subr.bf16.mxu0 0
        %1412 = vmatpush1.bf16.msra.mxu0 0
        %1413 = vmatprep.subr.bf16.mxu0 0
        %1414 = vmatpush1.bf16.msra.mxu0 0
        %1415 = vmatprep.subr.bf16.mxu0 0
        %1416 = vmatpush1.bf16.msra.mxu0 0
        %1417 = vmatprep.subr.bf16.mxu0 0
        %1418 = vmatpush1.bf16.msra.mxu0 0
        %1419 = vmatprep.subr.bf16.mxu0 0
        %1420 = vmatpush1.bf16.msra.mxu0 0
        %1421 = vmatprep.subr.bf16.mxu0 0
        %1422 = vmatpush1.bf16.msra.mxu0 0
        %1423 = vmatprep.subr.bf16.mxu0 0
        %1424 = vmatpush1.bf16.msra.mxu0 0
        %1425 = vmatprep.mubr.bf16.mxu0 0
        %1426 = vmatmul.mubr.bf16.gmra.mrb[0].mxu0 %v941
        %v1427 = vpop.f32.mrb[0].mxu0
        %v1428 = vadd.f32 0.0, %v1427
        %v1429 = vpop.f32.mrb[0].mxu0
        %v1430 = vpop.f32.mrb[0].mxu0
        %v1431 = vadd.f32 0.0, %v1430
        %v1432 = vpop.f32.mrb[0].mxu0
        %1433 = vmatprep.mubr.bf16.mxu0 0
        %1434 = vmatmul.mubr.bf16.gmra.mrb[0].mxu0 %v944
        %v1435 = vpop.f32.mrb[0].mxu0
        %v1436 = vadd.f32 0.0, %v1435
        %v1437 = vpop.f32.mrb[0].mxu0
        %v1438 = vpop.f32.mrb[0].mxu0
        %v1439 = vadd.f32 0.0, %v1438
        %v1440 = vpop.f32.mrb[0].mxu0
        %1441 = vdwg.mxu0
        %v1446 = vunpack.c.l.b16 %v1372
        %v1447 = vunpack.c.l.b16 %v1373
        %v1448 = vunpack.c.l.b16 %v1374
        %v1449 = vunpack.c.l.b16 %v1375
        %v1450 = vpack.c.b16 %v1447, %v1446
        %v1451 = vpack.c.b16 %v1449, %v1448
        %1454 = vmatprep.subr.bf16.mxu0 0
        %1455 = vmatpush1.bf16.msra.mxu0 %v1450
        %1456 = vmatprep.subr.bf16.mxu0 0
        %1457 = vmatpush1.bf16.msra.mxu0 %v1451
        %1458 = vmatprep.subr.bf16.mxu0 0
        %1459 = vmatpush1.bf16.msra.mxu0 0
        %1460 = vmatprep.subr.bf16.mxu0 0
        %1461 = vmatpush1.bf16.msra.mxu0 0
        %1462 = vmatprep.subr.bf16.mxu0 0
        %1463 = vmatpush1.bf16.msra.mxu0 0
        %1464 = vmatprep.subr.bf16.mxu0 0
        %1465 = vmatpush1.bf16.msra.mxu0 0
        %1466 = vmatprep.subr.bf16.mxu0 0
        %1467 = vmatpush1.bf16.msra.mxu0 0
        %1468 = vmatprep.subr.bf16.mxu0 0
        %1469 = vmatpush1.bf16.msra.mxu0 0
        %1470 = vmatprep.subr.bf16.mxu0 0
        %1471 = vmatpush1.bf16.msra.mxu0 0
        %1472 = vmatprep.subr.bf16.mxu0 0
        %1473 = vmatpush1.bf16.msra.mxu0 0
        %1474 = vmatprep.subr.bf16.mxu0 0
        %1475 = vmatpush1.bf16.msra.mxu0 0
        %1476 = vmatprep.subr.bf16.mxu0 0
        %1477 = vmatpush1.bf16.msra.mxu0 0
        %1478 = vmatprep.subr.bf16.mxu0 0
        %1479 = vmatpush1.bf16.msra.mxu0 0
        %1480 = vmatprep.subr.bf16.mxu0 0
        %1481 = vmatpush1.bf16.msra.mxu0 0
        %1482 = vmatprep.subr.bf16.mxu0 0
        %1483 = vmatpush1.bf16.msra.mxu0 0
        %1484 = vmatprep.subr.bf16.mxu0 0
        %1485 = vmatpush1.bf16.msra.mxu0 0
        %1486 = vmatprep.mubr.bf16.mxu0 0
        %1487 = vmatmul.mubr.bf16.gmra.mrb[0].mxu0 %v586
        %v1488 = vpop.f32.mrb[0].mxu0
        %v1489 = vadd.f32 %v1428, %v1488
        %v1490 = vpop.f32.mrb[0].mxu0
        %v1491 = vpop.f32.mrb[0].mxu0
        %v1492 = vadd.f32 %v1431, %v1491
        %v1493 = vpop.f32.mrb[0].mxu0
        %1494 = vmatprep.mubr.bf16.mxu0 0
        %1495 = vmatmul.mubr.bf16.gmra.mrb[0].mxu0 %v589
        %v1496 = vpop.f32.mrb[0].mxu0
        %v1497 = vadd.f32 %v1436, %v1496
        %v1498 = vpop.f32.mrb[0].mxu0
        %v1499 = vpop.f32.mrb[0].mxu0
        %v1500 = vadd.f32 %v1439, %v1499
        %v1501 = vpop.f32.mrb[0].mxu0
        %1502 = vdwg.mxu0
        %s1503 = scalar_lea.vmem %s1, 224
        %v1504 = vld [vmem:[%s1503] sm:$0xf]
        %v1505 = vld [vmem:[%s1503 + $0x4] sm:$0xf]
        %v1506 = vld [vmem:[%s1503 + $0x8] sm:$0xf]
        %v1507 = vld [vmem:[%s1503 + $0xc] sm:$0xf]
        %v1512 = vunpack.c.l.b16 %v1504
        %v1513 = vunpack.c.l.b16 %v1505
        %v1514 = vunpack.c.l.b16 %v1506
        %v1515 = vunpack.c.l.b16 %v1507
        %v1516 = vpack.c.b16 %v1513, %v1512
        %v1517 = vpack.c.b16 %v1515, %v1514
        %1520 = vmatprep.subr.bf16.mxu0 0
        %1521 = vmatpush1.bf16.msra.mxu0 %v1516
        %1522 = vmatprep.subr.bf16.mxu0 0
        %1523 = vmatpush1.bf16.msra.mxu0 %v1517
        %1524 = vmatprep.subr.bf16.mxu0 0
        %1525 = vmatpush1.bf16.msra.mxu0 0
        %1526 = vmatprep.subr.bf16.mxu0 0
        %1527 = vmatpush1.bf16.msra.mxu0 0
        %1528 = vmatprep.subr.bf16.mxu0 0
        %1529 = vmatpush1.bf16.msra.mxu0 0
        %1530 = vmatprep.subr.bf16.mxu0 0
        %1531 = vmatpush1.bf16.msra.mxu0 0
        %1532 = vmatprep.subr.bf16.mxu0 0
        %1533 = vmatpush1.bf16.msra.mxu0 0
        %1534 = vmatprep.subr.bf16.mxu0 0
        %1535 = vmatpush1.bf16.msra.mxu0 0
        %1536 = vmatprep.subr.bf16.mxu0 0
        %1537 = vmatpush1.bf16.msra.mxu0 0
        %1538 = vmatprep.subr.bf16.mxu0 0
        %1539 = vmatpush1.bf16.msra.mxu0 0
        %1540 = vmatprep.subr.bf16.mxu0 0
        %1541 = vmatpush1.bf16.msra.mxu0 0
        %1542 = vmatprep.subr.bf16.mxu0 0
        %1543 = vmatpush1.bf16.msra.mxu0 0
        %1544 = vmatprep.subr.bf16.mxu0 0
        %1545 = vmatpush1.bf16.msra.mxu0 0
        %1546 = vmatprep.subr.bf16.mxu0 0
        %1547 = vmatpush1.bf16.msra.mxu0 0
        %1548 = vmatprep.subr.bf16.mxu0 0
        %1549 = vmatpush1.bf16.msra.mxu0 0
        %1550 = vmatprep.subr.bf16.mxu0 0
        %1551 = vmatpush1.bf16.msra.mxu0 0
        %1552 = vmatprep.mubr.bf16.mxu0 0
        %1553 = vmatmul.mubr.bf16.gmra.mrb[0].mxu0 %v1313
        %v1554 = vpop.f32.mrb[0].mxu0
        %v1555 = vadd.f32 0.0, %v1554
        %v1556 = vpop.f32.mrb[0].mxu0
        %v1557 = vpop.f32.mrb[0].mxu0
        %v1558 = vadd.f32 0.0, %v1557
        %v1559 = vpop.f32.mrb[0].mxu0
        %1560 = vmatprep.mubr.bf16.mxu0 0
        %1561 = vmatmul.mubr.bf16.gmra.mrb[0].mxu0 %v1316
        %v1562 = vpop.f32.mrb[0].mxu0
        %v1563 = vadd.f32 0.0, %v1562
        %v1564 = vpop.f32.mrb[0].mxu0
        %v1565 = vpop.f32.mrb[0].mxu0
        %v1566 = vadd.f32 0.0, %v1565
        %v1567 = vpop.f32.mrb[0].mxu0
        %1568 = vdwg.mxu0
        %v1569 = vadd.f32 %v1489, %v1555
        %v1570 = vadd.f32 %v1492, %v1558
        %v1571 = vadd.f32 %v1497, %v1563
        %v1572 = vadd.f32 %v1500, %v1566
        %v1573 = vld [vmem:[%s1134] sm:$0xe]
        %v1574 = vld [vmem:[%s1134 + $0x8] sm:$0xe]
        %v1575 = vld [vmem:[%s1134 + $0x10] sm:$0xe]
        %v1576 = vld [vmem:[%s1134 + $0x18] sm:$0xe]
        %v1585 = vrot.slane %v1573, 5
        %v1586 = vrot.slane %v1585, 4
        %v1587 = vrot.slane %v1226, 5
        %v1588 = vsel %vm663, %v1586, %v1587
        %v1589 = vrot.slane %v1574, 5
        %v1590 = vrot.slane %v1589, 4
        %v1591 = vrot.slane %v1228, 5
        %v1592 = vsel %vm663, %v1590, %v1591
        %v1593 = vrot.slane %v1575, 5
        %v1594 = vrot.slane %v1593, 4
        %v1595 = vrot.slane %v1230, 5
        %v1596 = vsel %vm663, %v1594, %v1595
        %v1597 = vrot.slane %v1576, 5
        %v1598 = vrot.slane %v1597, 4
        %v1599 = vrot.slane %v1232, 5
        %v1600 = vsel %vm663, %v1598, %v1599
        %s1601 = scalar_lea.vmem %s1, 240
        %v1602 = vld [vmem:[%s1601] sm:$0xf]
        %v1603 = vld [vmem:[%s1601 + $0x4] sm:$0xf]
        %v1604 = vld [vmem:[%s1601 + $0x8] sm:$0xf]
        %v1605 = vld [vmem:[%s1601 + $0xc] sm:$0xf]
        %v1606 = vunpack.c.l.b16 %v1588
        %v1607 = vunpack.c.l.b16 %v1592
        %v1608 = vunpack.c.l.b16 %v1596
        %v1609 = vunpack.c.l.b16 %v1600
        %v1610 = vpack.c.b16 %v1607, %v1606
        %v1611 = vpack.c.b16 %v1609, %v1608
        %v1616 = vunpack.c.l.b16 %v1602
        %v1617 = vunpack.c.l.b16 %v1603
        %v1618 = vunpack.c.l.b16 %v1604
        %v1619 = vunpack.c.l.b16 %v1605
        %v1620 = vpack.c.b16 %v1617, %v1616
        %v1621 = vpack.c.b16 %v1619, %v1618
        %v1625 = vsel %vm271, %v1610, 0
        %v1628 = vsel %vm271, %v1611, 0
        %1630 = vmatprep.subr.bf16.mxu0 0
        %1631 = vmatpush1.bf16.msra.mxu0 %v1620
        %1632 = vmatprep.subr.bf16.mxu0 0
        %1633 = vmatpush1.bf16.msra.mxu0 %v1621
        %1634 = vmatprep.subr.bf16.mxu0 0
        %1635 = vmatpush1.bf16.msra.mxu0 0
        %1636 = vmatprep.subr.bf16.mxu0 0
        %1637 = vmatpush1.bf16.msra.mxu0 0
        %1638 = vmatprep.subr.bf16.mxu0 0
        %1639 = vmatpush1.bf16.msra.mxu0 0
        %1640 = vmatprep.subr.bf16.mxu0 0
        %1641 = vmatpush1.bf16.msra.mxu0 0
        %1642 = vmatprep.subr.bf16.mxu0 0
        %1643 = vmatpush1.bf16.msra.mxu0 0
        %1644 = vmatprep.subr.bf16.mxu0 0
        %1645 = vmatpush1.bf16.msra.mxu0 0
        %1646 = vmatprep.subr.bf16.mxu0 0
        %1647 = vmatpush1.bf16.msra.mxu0 0
        %1648 = vmatprep.subr.bf16.mxu0 0
        %1649 = vmatpush1.bf16.msra.mxu0 0
        %1650 = vmatprep.subr.bf16.mxu0 0
        %1651 = vmatpush1.bf16.msra.mxu0 0
        %1652 = vmatprep.subr.bf16.mxu0 0
        %1653 = vmatpush1.bf16.msra.mxu0 0
        %1654 = vmatprep.subr.bf16.mxu0 0
        %1655 = vmatpush1.bf16.msra.mxu0 0
        %1656 = vmatprep.subr.bf16.mxu0 0
        %1657 = vmatpush1.bf16.msra.mxu0 0
        %1658 = vmatprep.subr.bf16.mxu0 0
        %1659 = vmatpush1.bf16.msra.mxu0 0
        %1660 = vmatprep.subr.bf16.mxu0 0
        %1661 = vmatpush1.bf16.msra.mxu0 0
        %1662 = vmatprep.mubr.bf16.mxu0 0
        %1663 = vmatmul.mubr.bf16.gmra.mrb[0].mxu0 %v1625
        %v1664 = vpop.f32.mrb[0].mxu0
        %v1665 = vadd.f32 0.0, %v1664
        %v1666 = vpop.f32.mrb[0].mxu0
        %v1667 = vpop.f32.mrb[0].mxu0
        %v1668 = vadd.f32 0.0, %v1667
        %v1669 = vpop.f32.mrb[0].mxu0
        %1670 = vmatprep.mubr.bf16.mxu0 0
        %1671 = vmatmul.mubr.bf16.gmra.mrb[0].mxu0 %v1628
        %v1672 = vpop.f32.mrb[0].mxu0
        %v1673 = vadd.f32 0.0, %v1672
        %v1674 = vpop.f32.mrb[0].mxu0
        %v1675 = vpop.f32.mrb[0].mxu0
        %v1676 = vadd.f32 0.0, %v1675
        %v1677 = vpop.f32.mrb[0].mxu0
        %1678 = vdwg.mxu0
        %v1679 = vadd.f32 %v1569, %v1665
        %v1680 = vadd.f32 %v1570, %v1668
        %v1681 = vadd.f32 %v1571, %v1673
        %v1682 = vadd.f32 %v1572, %v1676
        // Predicated region
        $region33: #{unet_up_forward.1} parent=27 // pred_check
          %p1683 = pneg %p165
        $region34: #{unet_up_forward.1} parent=27 // pred_check_branch
          %1685 = sbr.rel (%p1683) target = $region36
        $region35: #{unet_up_forward.1} parent=27 // pred_region
          %vm1686 = vcmask 130048
          %v1687 = vsel %vm1686, %v640, 0.0
          %v1688 = vsel %vm1686, %v641, 0.0
          %v1689 = vadd.f32 %v1687, %v1688
          %v1690 = vsel %vm1686, %v642, 0.0
          %v1691 = vadd.f32 %v1689, %v1690
          %v1692 = vsel %vm1686, %v643, 0.0
          %v1693 = vadd.f32 %v1691, %v1692
          %v1694 = vrot.slane %v1693, 4
          %v1695 = vadd.f32 %v1693, %v1694
          %v1696 = vrot.slane %v1695, 2
          %v1697 = vadd.f32 %v1695, %v1696
          %v1698 = vrot.slane %v1697, 1
          %v1699 = vadd.f32 %v1697, %v1698
          %v1700 = vadd.f32 %v1699, 0.0
          %v1701 = vmul.f32 %v640, %v640
          %v1702 = vmul.f32 %v641, %v641
          %v1703 = vmul.f32 %v642, %v642
          %v1704 = vmul.f32 %v643, %v643
          %v1705 = vsel %vm1686, %v1701, 0.0
          %v1706 = vsel %vm1686, %v1702, 0.0
          %v1707 = vadd.f32 %v1705, %v1706
          %v1708 = vsel %vm1686, %v1703, 0.0
          %v1709 = vadd.f32 %v1707, %v1708
          %v1710 = vsel %vm1686, %v1704, 0.0
          %v1711 = vadd.f32 %v1709, %v1710
          %v1712 = vrot.slane %v1711, 4
          %v1713 = vadd.f32 %v1711, %v1712
          %v1714 = vrot.slane %v1713, 2
          %v1715 = vadd.f32 %v1713, %v1714
          %v1716 = vrot.slane %v1715, 1
          %v1717 = vadd.f32 %v1715, %v1716
          %v1718 = vadd.f32 %v1717, 0.0
          %v1719 = vsel %vm1686, %v995, 0.0
          %v1720 = vsel %vm1686, %v996, 0.0
          %v1721 = vadd.f32 %v1719, %v1720
          %v1722 = vsel %vm1686, %v997, 0.0
          %v1723 = vadd.f32 %v1721, %v1722
          %v1724 = vsel %vm1686, %v998, 0.0
          %v1725 = vadd.f32 %v1723, %v1724
          %v1726 = vrot.slane %v1725, 4
          %v1727 = vadd.f32 %v1725, %v1726
          %v1728 = vrot.slane %v1727, 2
          %v1729 = vadd.f32 %v1727, %v1728
          %v1730 = vrot.slane %v1729, 1
          %v1731 = vadd.f32 %v1729, %v1730
          %v1732 = vadd.f32 %v1700, %v1731
          %v1733 = vmul.f32 %v995, %v995
          %v1734 = vmul.f32 %v996, %v996
          %v1735 = vmul.f32 %v997, %v997
          %v1736 = vmul.f32 %v998, %v998
          %v1737 = vsel %vm1686, %v1733, 0.0
          %v1738 = vsel %vm1686, %v1734, 0.0
          %v1739 = vadd.f32 %v1737, %v1738
          %v1740 = vsel %vm1686, %v1735, 0.0
          %v1741 = vadd.f32 %v1739, %v1740
          %v1742 = vsel %vm1686, %v1736, 0.0
          %v1743 = vadd.f32 %v1741, %v1742
          %v1744 = vrot.slane %v1743, 4
          %v1745 = vadd.f32 %v1743, %v1744
          %v1746 = vrot.slane %v1745, 2
          %v1747 = vadd.f32 %v1745, %v1746
          %v1748 = vrot.slane %v1747, 1
          %v1749 = vadd.f32 %v1747, %v1748
          %v1750 = vadd.f32 %v1718, %v1749
          %v1751 = vsel %vm1686, %v1367, 0.0
          %v1752 = vsel %vm1686, %v1368, 0.0
          %v1753 = vadd.f32 %v1751, %v1752
          %v1754 = vsel %vm1686, %v1369, 0.0
          %v1755 = vadd.f32 %v1753, %v1754
          %v1756 = vsel %vm1686, %v1370, 0.0
          %v1757 = vadd.f32 %v1755, %v1756
          %v1758 = vrot.slane %v1757, 4
          %v1759 = vadd.f32 %v1757, %v1758
          %v1760 = vrot.slane %v1759, 2
          %v1761 = vadd.f32 %v1759, %v1760
          %v1762 = vrot.slane %v1761, 1
          %v1763 = vadd.f32 %v1761, %v1762
          %v1764 = vadd.f32 %v1732, %v1763
          %v1765 = vmul.f32 %v1367, %v1367
          %v1766 = vmul.f32 %v1368, %v1368
          %v1767 = vmul.f32 %v1369, %v1369
          %v1768 = vmul.f32 %v1370, %v1370
          %v1769 = vsel %vm1686, %v1765, 0.0
          %v1770 = vsel %vm1686, %v1766, 0.0
          %v1771 = vadd.f32 %v1769, %v1770
          %v1772 = vsel %vm1686, %v1767, 0.0
          %v1773 = vadd.f32 %v1771, %v1772
          %v1774 = vsel %vm1686, %v1768, 0.0
          %v1775 = vadd.f32 %v1773, %v1774
          %v1776 = vrot.slane %v1775, 4
          %v1777 = vadd.f32 %v1775, %v1776
          %v1778 = vrot.slane %v1777, 2
          %v1779 = vadd.f32 %v1777, %v1778
          %v1780 = vrot.slane %v1779, 1
          %v1781 = vadd.f32 %v1779, %v1780
          %v1782 = vadd.f32 %v1750, %v1781
          %v1783 = vsel %vm1686, %v1679, 0.0
          %v1784 = vsel %vm1686, %v1680, 0.0
          %v1785 = vadd.f32 %v1783, %v1784
          %v1786 = vsel %vm1686, %v1681, 0.0
          %v1787 = vadd.f32 %v1785, %v1786
          %v1788 = vsel %vm1686, %v1682, 0.0
          %v1789 = vadd.f32 %v1787, %v1788
          %v1790 = vrot.slane %v1789, 4
          %v1791 = vadd.f32 %v1789, %v1790
          %v1792 = vrot.slane %v1791, 2
          %v1793 = vadd.f32 %v1791, %v1792
          %v1794 = vrot.slane %v1793, 1
          %v1795 = vadd.f32 %v1793, %v1794
          %v1796 = vadd.f32 %v1764, %v1795
          %v1797 = vmul.f32 %v1679, %v1679
          %v1798 = vmul.f32 %v1680, %v1680
          %v1799 = vmul.f32 %v1681, %v1681
          %v1800 = vmul.f32 %v1682, %v1682
          %v1801 = vsel %vm1686, %v1797, 0.0
          %v1802 = vsel %vm1686, %v1798, 0.0
          %v1803 = vadd.f32 %v1801, %v1802
          %v1804 = vsel %vm1686, %v1799, 0.0
          %v1805 = vadd.f32 %v1803, %v1804
          %v1806 = vsel %vm1686, %v1800, 0.0
          %v1807 = vadd.f32 %v1805, %v1806
          %v1808 = vrot.slane %v1807, 4
          %v1809 = vadd.f32 %v1807, %v1808
          %v1810 = vrot.slane %v1809, 2
          %v1811 = vadd.f32 %v1809, %v1810
          %v1812 = vrot.slane %v1811, 1
          %v1813 = vadd.f32 %v1811, %v1812
          %v1814 = vadd.f32 %v1782, %v1813
          %v1815 = vld [vmem:[#allocation2] sm:$0x1]
          %v1816 = vadd.f32 %v1815, %v1796
          %vm1817 = vcmask 122880
          %1818 = vst.msk [vmem:[#allocation2] sm:$0x1] %vm1817, %v1816
          %v1819 = vld [vmem:[#allocation3] sm:$0x1]
          %v1820 = vadd.f32 %v1819, %v1814
          %1821 = vst.msk [vmem:[#allocation3] sm:$0x1] %vm1817, %v1820
        $region36: #{unet_up_forward.1} parent=27 // pred_fallthru
          _
        %p1822 = scmp.eq.s32.totalorder %s19, 1
        // Predicated region
        $region37: #{unet_up_forward.1} parent=27 // pred_check
          %p1823 = pneg %p1822
        $region38: #{unet_up_forward.1} parent=27 // pred_check_branch
          %1825 = sbr.rel (%p1823) target = $region40
        $region39: #{unet_up_forward.1} parent=27 // pred_region
          %v1826 = vld [vmem:[#allocation2] sm:$0x1]
          %v1827 = vmul.f32 %v1826, 0.00390625
          %v1828 = vld [vmem:[#allocation3] sm:$0x1]
          %v1829 = vmul.f32 %v1828, 0.00390625
          %v1830 = vmul.f32 %v1827, %v1827
          %v1831 = vsub.f32 %v1829, %v1830
          %v1832 = vmax.f32 %v1831, 0.0
          %v1833 = vadd.f32 %v1832, 1e-05
          %v1834 = vrsqrt.pop %v1833
          %v1836 = vlaneseq
          %v1837 = vshrl.u32 %v1836, 7
          %v1838 = vsub.s32 0, %v1837
          %v1839 = vrot.slane %v1827, %v1838
          %v1841 = vsub.f32 %v640, %v1839
          %v1842 = vsub.f32 %v641, %v1839
          %v1843 = vsub.f32 %v642, %v1839
          %v1844 = vsub.f32 %v643, %v1839
          %v1846 = vlaneseq
          %v1847 = vshrl.u32 %v1846, 7
          %v1848 = vsub.s32 0, %v1847
          %v1849 = vrot.slane %v1834, %v1848
          %v1851 = vmul.f32 %v1841, %v1849
          %v1852 = vmul.f32 %v1842, %v1849
          %v1853 = vmul.f32 %v1843, %v1849
          %v1854 = vmul.f32 %v1844, %v1849
          %v1855 = vmax.f32 %v1851, 0.0
          %v1856 = vmax.f32 %v1852, 0.0
          %v1857 = vmax.f32 %v1853, 0.0
          %v1858 = vmax.f32 %v1854, 0.0
          %v1859 = vpack.c.bf16 %v1855, %v1855
          %v1860 = vpack.c.bf16 %v1856, %v1856
          %v1861 = vpack.c.bf16 %v1857, %v1857
          %v1862 = vpack.c.bf16 %v1858, %v1858
          %vm1863 = vcmask 125952
          %1864 = vst.msk [vmem:[%s155] sm:$0xf] %vm1863, %v1859
          %1865 = vst.msk [vmem:[%s155 + $0x4] sm:$0xf] %vm1863, %v1860
          %1866 = vst.msk [vmem:[%s155 + $0x8] sm:$0xf] %vm1863, %v1861
          %1867 = vst.msk [vmem:[%s155 + $0xc] sm:$0xf] %vm1863, %v1862
          %v1868 = vsub.f32 %v995, %v1839
          %v1869 = vsub.f32 %v996, %v1839
          %v1870 = vsub.f32 %v997, %v1839
          %v1871 = vsub.f32 %v998, %v1839
          %v1872 = vmul.f32 %v1868, %v1849
          %v1873 = vmul.f32 %v1869, %v1849
          %v1874 = vmul.f32 %v1870, %v1849
          %v1875 = vmul.f32 %v1871, %v1849
          %v1876 = vmax.f32 %v1872, 0.0
          %v1877 = vmax.f32 %v1873, 0.0
          %v1878 = vmax.f32 %v1874, 0.0
          %v1879 = vmax.f32 %v1875, 0.0
          %v1880 = vpack.c.bf16 %v1876, %v1876
          %v1881 = vpack.c.bf16 %v1877, %v1877
          %v1882 = vpack.c.bf16 %v1878, %v1878
          %v1883 = vpack.c.bf16 %v1879, %v1879
          %s1884 = scalar_lea.vmem %s155, 16 [#allocation4]
          %1885 = vst.msk [vmem:[%s1884] sm:$0xf] %vm1863, %v1880
          %1886 = vst.msk [vmem:[%s1884 + $0x4] sm:$0xf] %vm1863, %v1881
          %1887 = vst.msk [vmem:[%s1884 + $0x8] sm:$0xf] %vm1863, %v1882
          %1888 = vst.msk [vmem:[%s1884 + $0xc] sm:$0xf] %vm1863, %v1883
          %v1889 = vsub.f32 %v1367, %v1839
          %v1890 = vsub.f32 %v1368, %v1839
          %v1891 = vsub.f32 %v1369, %v1839
          %v1892 = vsub.f32 %v1370, %v1839
          %v1893 = vmul.f32 %v1889, %v1849
          %v1894 = vmul.f32 %v1890, %v1849
          %v1895 = vmul.f32 %v1891, %v1849
          %v1896 = vmul.f32 %v1892, %v1849
          %v1897 = vmax.f32 %v1893, 0.0
          %v1898 = vmax.f32 %v1894, 0.0
          %v1899 = vmax.f32 %v1895, 0.0
          %v1900 = vmax.f32 %v1896, 0.0
          %v1901 = vpack.c.bf16 %v1897, %v1897
          %v1902 = vpack.c.bf16 %v1898, %v1898
          %v1903 = vpack.c.bf16 %v1899, %v1899
          %v1904 = vpack.c.bf16 %v1900, %v1900
          %s1905 = scalar_lea.vmem %s155, 32 [#allocation4]
          %1906 = vst.msk [vmem:[%s1905] sm:$0xf] %vm1863, %v1901
          %1907 = vst.msk [vmem:[%s1905 + $0x4] sm:$0xf] %vm1863, %v1902
          %1908 = vst.msk [vmem:[%s1905 + $0x8] sm:$0xf] %vm1863, %v1903
          %1909 = vst.msk [vmem:[%s1905 + $0xc] sm:$0xf] %vm1863, %v1904
          %v1910 = vsub.f32 %v1679, %v1839
          %v1911 = vsub.f32 %v1680, %v1839
          %v1912 = vsub.f32 %v1681, %v1839
          %v1913 = vsub.f32 %v1682, %v1839
          %v1914 = vmul.f32 %v1910, %v1849
          %v1915 = vmul.f32 %v1911, %v1849
          %v1916 = vmul.f32 %v1912, %v1849
          %v1917 = vmul.f32 %v1913, %v1849
          %v1918 = vmax.f32 %v1914, 0.0
          %v1919 = vmax.f32 %v1915, 0.0
          %v1920 = vmax.f32 %v1916, 0.0
          %v1921 = vmax.f32 %v1917, 0.0
          %v1922 = vpack.c.bf16 %v1918, %v1918
          %v1923 = vpack.c.bf16 %v1919, %v1919
          %v1924 = vpack.c.bf16 %v1920, %v1920
          %v1925 = vpack.c.bf16 %v1921, %v1921
          %s1926 = scalar_lea.vmem %s155, 48 [#allocation4]
          %1927 = vst.msk [vmem:[%s1926] sm:$0xf] %vm1863, %v1922
          %1928 = vst.msk [vmem:[%s1926 + $0x4] sm:$0xf] %vm1863, %v1923
          %1929 = vst.msk [vmem:[%s1926 + $0x8] sm:$0xf] %vm1863, %v1924
          %1930 = vst.msk [vmem:[%s1926 + $0xc] sm:$0xf] %vm1863, %v1925
        $region40: #{unet_up_forward.1} parent=27 // pred_fallthru
          _
        %s1931 = sand.u32 %s91, 1
        %s1932 = sand.u32 %s91, 1
        %s1933 = smul.addr %s1932, 64
        %s1934 = scalar_lea.vmem [#allocation4], %s1933
        // Predicated region
        $region41: #{unet_up_forward.1} parent=27 // pred_check
          %p1935 = pneg %p101
        $region42: #{unet_up_forward.1} parent=27 // pred_check_branch
          %1937 = sbr.rel (%p1935) target = $region44
        $region43: #{unet_up_forward.1} parent=27 // pred_region
          %s1938 = smul.u32 %s20, %s19
          %s1939 = smul.u32 4, %s1938
          %s1940 = smul.addr %s18, 32
          %s1941 = sadd.s32 %s1939, %s1940
          %s1942 = smul.addr %s1941, 4
          %s1943 = scalar_lea.vmem %s2, %s1942
          // Predicated region
          $region45: #{unet_up_forward.1} parent=43 // pred_check
            _
          $region46: #{unet_up_forward.1} parent=43 // pred_check_branch
            %1945 = sbr.rel (0) target = $region48
          $region47: #{unet_up_forward.1} parent=43 // pred_region
            // Predicated region
            $region49: #{unet_up_forward.1} parent=47 // pred_check
              _
            $region50: #{unet_up_forward.1} parent=47 // pred_check_branch
              %1947 = sbr.rel target = $region52
            $region51: #{unet_up_forward.1} parent=47 // pred_region
              // Predicated region
              $region64: #{unet_up_forward.1} parent=51 // pred_check
                _
              $region65: #{unet_up_forward.1} parent=51 // pred_check_branch
                %1992 = sbr.rel (0) target = $region67
              $region66: #{unet_up_forward.1} parent=51 // pred_region
                loop: start=0, step=1, limit=1
                $region68: #{unet_up_forward.1} parent=66 // loop_pre_header
                  _
                $region69: #{unet_up_forward.1} parent=66 // loop_header
                  %s1994 = sphi 0, %s1998
                  %p1995 = scmp.ge.s32.totalorder %s1994, 1
                  %s1999 = sphi %s1934, %s1934
                  %s2000 = sphi %s1943, %s1943
                $region70: #{unet_up_forward.1} parent=66 // loop_header_branch
                  %1997 = sbr.rel (%p1995) target = $region74
                $region71: #{unet_up_forward.1} parent=66 // loop_body
                  _
                $region72: #{unet_up_forward.1} parent=66 // loop_footer
                  %s1998 = sadd.s32 1, %s1994
                $region73: #{unet_up_forward.1} parent=66 // loop_footer_branch
                  %1993 = sbr.rel target = $region69
                $region74: #{unet_up_forward.1} parent=66 // loop_exit
                  _
                loop: start=0, step=1, limit=1
                $region75: #{unet_up_forward.1} parent=66 // loop_pre_header
                  _
                $region76: #{unet_up_forward.1} parent=66 // loop_header
                  %s2003 = sphi 0, %s2007
                  %p2004 = scmp.ge.s32.totalorder %s2003, 1
                  %s2008 = sphi %s1934, %s1934
                  %s2009 = sphi %s1943, %s1943
                $region77: #{unet_up_forward.1} parent=66 // loop_header_branch
                  %2006 = sbr.rel (%p2004) target = $region81
                $region78: #{unet_up_forward.1} parent=66 // loop_body
                  %v2010 = vld [vmem:[%s2008] sm:$0xf]
                  %2011 = vst [vmem:[%s2009] sm:$0xf] %v2010
                  %v2012 = vld [vmem:[%s2008 + $0x4] sm:$0xf]
                  %2013 = vst [vmem:[%s2009 + $0x4] sm:$0xf] %v2012
                  %v2014 = vld [vmem:[%s2008 + $0x8] sm:$0xf]
                  %2015 = vst [vmem:[%s2009 + $0x8] sm:$0xf] %v2014
                  %v2016 = vld [vmem:[%s2008 + $0xc] sm:$0xf]
                  %2017 = vst [vmem:[%s2009 + $0xc] sm:$0xf] %v2016
                  %v2018 = vld [vmem:[%s2008 + $0x10] sm:$0xf]
                  %2019 = vst [vmem:[%s2009 + $0x20] sm:$0xf] %v2018
                  %v2020 = vld [vmem:[%s2008 + $0x14] sm:$0xf]
                  %2021 = vst [vmem:[%s2009 + $0x24] sm:$0xf] %v2020
                  %v2022 = vld [vmem:[%s2008 + $0x18] sm:$0xf]
                  %2023 = vst [vmem:[%s2009 + $0x28] sm:$0xf] %v2022
                  %v2024 = vld [vmem:[%s2008 + $0x1c] sm:$0xf]
                  %2025 = vst [vmem:[%s2009 + $0x2c] sm:$0xf] %v2024
                  %v2026 = vld [vmem:[%s2008 + $0x20] sm:$0xf]
                  %2027 = vst [vmem:[%s2009 + $0x40] sm:$0xf] %v2026
                  %v2028 = vld [vmem:[%s2008 + $0x24] sm:$0xf]
                  %2029 = vst [vmem:[%s2009 + $0x44] sm:$0xf] %v2028
                  %v2030 = vld [vmem:[%s2008 + $0x28] sm:$0xf]
                  %2031 = vst [vmem:[%s2009 + $0x48] sm:$0xf] %v2030
                  %v2032 = vld [vmem:[%s2008 + $0x2c] sm:$0xf]
                  %2033 = vst [vmem:[%s2009 + $0x4c] sm:$0xf] %v2032
                  %v2034 = vld [vmem:[%s2008 + $0x30] sm:$0xf]
                  %2035 = vst [vmem:[%s2009 + $0x60] sm:$0xf] %v2034
                  %v2036 = vld [vmem:[%s2008 + $0x34] sm:$0xf]
                  %2037 = vst [vmem:[%s2009 + $0x64] sm:$0xf] %v2036
                  %v2038 = vld [vmem:[%s2008 + $0x38] sm:$0xf]
                  %2039 = vst [vmem:[%s2009 + $0x68] sm:$0xf] %v2038
                  %v2040 = vld [vmem:[%s2008 + $0x3c] sm:$0xf]
                  %2041 = vst [vmem:[%s2009 + $0x6c] sm:$0xf] %v2040
                $region79: #{unet_up_forward.1} parent=66 // loop_footer
                  %s2007 = sadd.s32 1, %s2003
                $region80: #{unet_up_forward.1} parent=66 // loop_footer_branch
                  %2002 = sbr.rel target = $region76
                $region81: #{unet_up_forward.1} parent=66 // loop_exit
                  _
              $region67: #{unet_up_forward.1} parent=51 // pred_fallthru
                _
            $region52: #{unet_up_forward.1} parent=47 // pred_fallthru
              _
            // Predicated region
            $region53: #{unet_up_forward.1} parent=47 // pred_check
              _
            $region54: #{unet_up_forward.1} parent=47 // pred_check_branch
              %1949 = sbr.rel (0) target = $region56
            $region55: #{unet_up_forward.1} parent=47 // pred_region
              loop: start=0, step=1, limit=1
              $region57: #{unet_up_forward.1} parent=55 // loop_pre_header
                _
              $region58: #{unet_up_forward.1} parent=55 // loop_header
                %s1952 = sphi 0, %s1956
                %p1953 = scmp.ge.s32.totalorder %s1952, 1
                %s1957 = sphi %s1934, %s1934
                %s1958 = sphi %s1943, %s1943
              $region59: #{unet_up_forward.1} parent=55 // loop_header_branch
                %1955 = sbr.rel (%p1953) target = $region63
              $region60: #{unet_up_forward.1} parent=55 // loop_body
                %v1959 = vld [vmem:[%s1957] sm:$0xf]
                %1960 = vst [vmem:[%s1958] sm:$0xf] %v1959
                %v1961 = vld [vmem:[%s1957 + $0x4] sm:$0xf]
                %1962 = vst [vmem:[%s1958 + $0x4] sm:$0xf] %v1961
                %v1963 = vld [vmem:[%s1957 + $0x8] sm:$0xf]
                %1964 = vst [vmem:[%s1958 + $0x8] sm:$0xf] %v1963
                %v1965 = vld [vmem:[%s1957 + $0xc] sm:$0xf]
                %1966 = vst [vmem:[%s1958 + $0xc] sm:$0xf] %v1965
                %v1967 = vld [vmem:[%s1957 + $0x10] sm:$0xf]
                %1968 = vst [vmem:[%s1958 + $0x20] sm:$0xf] %v1967
                %v1969 = vld [vmem:[%s1957 + $0x14] sm:$0xf]
                %1970 = vst [vmem:[%s1958 + $0x24] sm:$0xf] %v1969
                %v1971 = vld [vmem:[%s1957 + $0x18] sm:$0xf]
                %1972 = vst [vmem:[%s1958 + $0x28] sm:$0xf] %v1971
                %v1973 = vld [vmem:[%s1957 + $0x1c] sm:$0xf]
                %1974 = vst [vmem:[%s1958 + $0x2c] sm:$0xf] %v1973
                %v1975 = vld [vmem:[%s1957 + $0x20] sm:$0xf]
                %1976 = vst [vmem:[%s1958 + $0x40] sm:$0xf] %v1975
                %v1977 = vld [vmem:[%s1957 + $0x24] sm:$0xf]
                %1978 = vst [vmem:[%s1958 + $0x44] sm:$0xf] %v1977
                %v1979 = vld [vmem:[%s1957 + $0x28] sm:$0xf]
                %1980 = vst [vmem:[%s1958 + $0x48] sm:$0xf] %v1979
                %v1981 = vld [vmem:[%s1957 + $0x2c] sm:$0xf]
                %1982 = vst [vmem:[%s1958 + $0x4c] sm:$0xf] %v1981
                %v1983 = vld [vmem:[%s1957 + $0x30] sm:$0xf]
                %1984 = vst [vmem:[%s1958 + $0x60] sm:$0xf] %v1983
                %v1985 = vld [vmem:[%s1957 + $0x34] sm:$0xf]
                %1986 = vst [vmem:[%s1958 + $0x64] sm:$0xf] %v1985
                %v1987 = vld [vmem:[%s1957 + $0x38] sm:$0xf]
                %1988 = vst [vmem:[%s1958 + $0x68] sm:$0xf] %v1987
                %v1989 = vld [vmem:[%s1957 + $0x3c] sm:$0xf]
                %1990 = vst [vmem:[%s1958 + $0x6c] sm:$0xf] %v1989
              $region61: #{unet_up_forward.1} parent=55 // loop_footer
                %s1956 = sadd.s32 1, %s1952
              $region62: #{unet_up_forward.1} parent=55 // loop_footer_branch
                %1951 = sbr.rel target = $region58
              $region63: #{unet_up_forward.1} parent=55 // loop_exit
                _
            $region56: #{unet_up_forward.1} parent=47 // pred_fallthru
              _
          $region48: #{unet_up_forward.1} parent=43 // pred_fallthru
            _
          %2042 = vnop
        $region44: #{unet_up_forward.1} parent=27 // pred_fallthru
          _
      $region28: #{unet_up_forward.1} parent=5 // pred_fallthru
        _
      %p2043 = scmp.le.s32.totalorder 2, %s8
      // Predicated region
      $region82: #{unet_up_forward.1} parent=5 // pred_check
        %p2044 = pneg %p2043
      $region83: #{unet_up_forward.1} parent=5 // pred_check_branch
        %2046 = sbr.rel (%p2044) target = $region85
      $region84: #{unet_up_forward.1} parent=5 // pred_region
        %s2047 = ssub.s32 %s8, 2
        // Predicated region
        $region86: #{unet_up_forward.1} parent=84 // pred_check
          %p2048 = pneg %p107
        $region87: #{unet_up_forward.1} parent=84 // pred_check_branch
          %2050 = sbr.rel (%p2048) target = $region89
        $region88: #{unet_up_forward.1} parent=84 // pred_region
          %s2051 = sand.u32 %s92, 1
          %s2052 = sand.u32 %s92, 1
          %s2053 = smul.addr %s2052, 64
          %s2054 = scalar_lea.vmem [#allocation4], %s2053
        $region89: #{unet_up_forward.1} parent=84 // pred_fallthru
          _
      $region85: #{unet_up_forward.1} parent=5 // pred_fallthru
        _
    $region6: #{unet_up_forward.1} parent=1 // loop_footer
      %s12 = sadd.s32 1, %s8
    $region7: #{unet_up_forward.1} parent=1 // loop_footer_branch
      %7 = sbr.rel target = $region3
    $region8: #{unet_up_forward.1} parent=1 // loop_exit
      _

</llo_original>
